<compile_context>
chip_gen: v7x
topology: tpu7x:2x2x1
jax: 0.10.0
libtpu: 0.0.40
codegen_flags: <defaults>
</compile_context>

<pallas_src>
import math

import jax
import jax.numpy as jnp
from jax import lax
from jax.experimental import pallas as pl
from jax.experimental.pallas import tpu as pltpu

D_MODEL = 512
NUM_HEADS = 8
D_K = D_MODEL // NUM_HEADS
SCALE = 1.0 / math.sqrt(D_K)          # 1/8, exactly representable (power of 2)

_VMEM_LIMIT_BYTES = 48 * 1024 * 1024  # < v7x 64 MiB physical; ample on v5e/v6e

# Row-tile targets (multiples of 8); shrunk to divisors of the actual dims.
_TM_TARGET = 512    # projection row tile
_TQ_TARGET = 256    # attention query tile
_TK_TARGET = 1024   # attention key/value tile (bf16 K/V)


def _pick_tile(dim, target):
    """Largest multiple of 8 that divides `dim` and is <= target; else full dim."""
    if dim <= target:
        return dim
    t = (target // 8) * 8
    while t >= 8:
        if dim % t == 0:
            return t
        t -= 8
    return dim


# ----------------------------- fused QKV projection -------------------------

def _qkv_proj_kernel(q_ref, k_ref, v_ref, w_ref, b_ref, o_ref):
    # q/k/v: (tm, D) f32; w: (3, D, D) bf16 pre-transposed (scale folded into
    # w[0]); b: (3, 1, D) f32; o: (3, tm, D) bf16.
    q = q_ref[...].astype(jnp.bfloat16)
    k = k_ref[...].astype(jnp.bfloat16)
    v = v_ref[...].astype(jnp.bfloat16)
    o_ref[0] = (jnp.dot(q, w_ref[0], preferred_element_type=jnp.float32)
                + b_ref[0]).astype(o_ref.dtype)
    o_ref[1] = (jnp.dot(k, w_ref[1], preferred_element_type=jnp.float32)
                + b_ref[1]).astype(o_ref.dtype)
    o_ref[2] = (jnp.dot(v, w_ref[2], preferred_element_type=jnp.float32)
                + b_ref[2]).astype(o_ref.dtype)


def _qkv_projection(q2d, k2d, v2d, w_qkv_t, b_qkv):
    M, D = q2d.shape
    tm = _pick_tile(M, _TM_TARGET)
    x_spec = pl.BlockSpec((tm, D), lambda i: (i, 0))
    w_spec = pl.BlockSpec((3, D, D), lambda i: (0, 0, 0))   # VMEM-resident
    b_spec = pl.BlockSpec((3, 1, D), lambda i: (0, 0, 0))
    o_spec = pl.BlockSpec((3, tm, D), lambda i: (0, i, 0))
    return pl.pallas_call(
        _qkv_proj_kernel,
        out_shape=jax.ShapeDtypeStruct((3, M, D), jnp.bfloat16),   # bf16 QKV stream
        grid=(M // tm,),
        in_specs=[x_spec, x_spec, x_spec, w_spec, b_spec],
        out_specs=o_spec,
        compiler_params=pltpu.CompilerParams(
            dimension_semantics=("parallel",),
            vmem_limit_bytes=_VMEM_LIMIT_BYTES),
    )(q2d, k2d, v2d, w_qkv_t, b_qkv)


# ----------------------------- flash attention + fused output proj ----------

def _flash_mha_kernel(q_ref, k_ref, v_ref, wo_ref, bo_ref, o_ref,
                      m_ref, l_ref, acc_ref):
    # q: (tq, D) bf16 (already scaled by 1/sqrt(d_k) via the folded W_q).
    # k/v: (tk, D) bf16, heads interleaved as 64-wide column groups.
    # wo: (D, D) bf16 resident; bo: (1, D) f32 resident.
    # scratch: m/l (tq, H) f32, acc (tq, D) f32 -- persist across kv steps.
    ki = pl.program_id(2)

    @pl.when(ki == 0)
    def _init():
        m_ref[...] = jnp.full_like(m_ref, -jnp.inf)
        l_ref[...] = jnp.zeros_like(l_ref)
        acc_ref[...] = jnp.zeros_like(acc_ref)

    # Per-head read-modify-write of the scratch slices: keeps live values to
    # roughly one head's working set instead of 8 pieces + a concatenate.
    for h in range(NUM_HEADS):          # static unroll over heads
        cs = slice(h * D_K, (h + 1) * D_K)
        hc = slice(h, h + 1)
        # QK^T without an explicit transpose (contract last dims). bf16 MXU,
        # f32 accumulation.
        s = lax.dot_general(q_ref[:, cs], k_ref[:, cs],
                            dimension_numbers=(((1,), (1,)), ((), ())),
                            preferred_element_type=jnp.float32)      # (tq, tk) f32
        m_prev = m_ref[:, hc]
        m_new = jnp.maximum(m_prev, jnp.max(s, axis=-1, keepdims=True))
        alpha = jnp.exp(m_prev - m_new)
        p = jnp.exp(s - m_new)                                        # f32
        l_ref[:, hc] = alpha * l_ref[:, hc] + jnp.sum(p, axis=-1, keepdims=True)
        acc_ref[:, cs] = (alpha * acc_ref[:, cs]
                          + jnp.dot(p.astype(jnp.bfloat16), v_ref[:, cs],
                                    preferred_element_type=jnp.float32))
        m_ref[:, hc] = m_new

    @pl.when(ki == pl.num_programs(2) - 1)
    def _finalize():
        inv = pl.reciprocal(l_ref[...], approx=True)   # (tq, H), EUP ~free
        # Normalize the accumulator in place (last kv step; scratch is re-init
        # at the next grid cell), then one lane-dense (tq, D) load for the
        # fused output projection.
        for h in range(NUM_HEADS):
            cs = slice(h * D_K, (h + 1) * D_K)
            acc_ref[:, cs] = acc_ref[:, cs] * inv[:, h:h + 1]
        ctx = acc_ref[...].astype(jnp.bfloat16)                        # (tq, D)
        o_ref[...] = (jnp.dot(ctx, wo_ref[...], preferred_element_type=jnp.float32)
                      + bo_ref[...]).astype(o_ref.dtype)


def _attention(qkv, w_o_t, b_o):
    # qkv: (3, B, S, D) bf16 -- [0]=Q-proj (pre-scaled), [1]=K-proj, [2]=V-proj.
    _, B, S, D = qkv.shape
    tq = _pick_tile(S, _TQ_TARGET)
    tk = _pick_tile(S, _TK_TARGET)
    # Guard against a pathological full-sequence K/V tile blowing VMEM (v7x).
    assert 4 * tk * D * qkv.dtype.itemsize <= _VMEM_LIMIT_BYTES // 2, \
        "K/V tile too large for the VMEM budget"

    q_spec = pl.BlockSpec((None, None, tq, D), lambda b, qi, ki: (0, b, qi, 0))
    k_spec = pl.BlockSpec((None, None, tk, D), lambda b, qi, ki: (1, b, ki, 0))
    v_spec = pl.BlockSpec((None, None, tk, D), lambda b, qi, ki: (2, b, ki, 0))
    wo_spec = pl.BlockSpec((D, D), lambda b, qi, ki: (0, 0))   # resident
    bo_spec = pl.BlockSpec((1, D), lambda b, qi, ki: (0, 0))   # resident
    o_spec = pl.BlockSpec((None, tq, D), lambda b, qi, ki: (b, qi, 0))

    return pl.pallas_call(
        _flash_mha_kernel,
        out_shape=jax.ShapeDtypeStruct((B, S, D), jnp.float32),
        grid=(B, S // tq, S // tk),
        in_specs=[q_spec, k_spec, v_spec, wo_spec, bo_spec],
        out_specs=o_spec,
        scratch_shapes=[
            pltpu.VMEM((tq, NUM_HEADS), jnp.float32),   # m (running max)
            pltpu.VMEM((tq, NUM_HEADS), jnp.float32),   # l (running denom)
            pltpu.VMEM((tq, D), jnp.float32),           # acc (unnormalized out)
        ],
        compiler_params=pltpu.CompilerParams(
            dimension_semantics=("parallel", "parallel", "arbitrary"),
            vmem_limit_bytes=_VMEM_LIMIT_BYTES),
    )(qkv, qkv, qkv, w_o_t, b_o.reshape(1, D))


# ----------------------------- Module wrapper --------------------------------

def init_params(key, d_model=D_MODEL):
    # nn.Linear(d_model, d_model): weight (out, in), bias (out,)
    ks = jax.random.split(key, 8)
    bound = 1.0 / math.sqrt(d_model)

    def w(k):
        return jax.random.uniform(k, (d_model, d_model), jnp.float32, -bound, bound)

    def b(k):
        return jax.random.uniform(k, (d_model,), jnp.float32, -bound, bound)

    wq, bq = w(ks[0]), b(ks[1])
    wk, bk = w(ks[2]), b(ks[3])
    wv, bv = w(ks[4]), b(ks[5])
    wo, bo = w(ks[6]), b(ks[7])

    return dict(
        # raw (PyTorch-layout) f32 weights, kept for the pure-JAX reference
        wq=wq, bq=bq, wk=wk, bk=bk, wv=wv, bv=bv, wo=wo, bo=bo,
        # kernel weights: pre-transposed, bf16, with 1/sqrt(d_k) folded into
        # W_q / b_q (1/8 is a power of two -> exact in bf16).
        w_qkv_t=jnp.stack([wq.T * SCALE, wk.T, wv.T], axis=0).astype(jnp.bfloat16),
        b_qkv=jnp.stack([bq * SCALE, bk, bv], axis=0).reshape(3, 1, d_model),  # f32
        w_o_t=wo.T.astype(jnp.bfloat16),
        b_o=bo,                                                                # f32
    )


def multi_head_attention(params, Q, K, V):
    # Q, K, V: (B, S, d_model).  mask=None path of the PyTorch forward.
    # TODO(synk): optional attention mask (masked_fill) not implemented since forward uses mask=None.
    B, S, D = Q.shape

    qkv = _qkv_projection(Q.reshape(B * S, D), K.reshape(B * S, D),
                          V.reshape(B * S, D),
                          params["w_qkv_t"], params["b_qkv"])       # (3, B*S, D) bf16
    qkv = qkv.reshape(3, B, S, D)                                   # free reshape

    # Flash attention with the W_o projection fused into the finalize step.
    return _attention(qkv, params["w_o_t"], params["b_o"])          # (B, S, D) f32


# ----------------------------- Pure-JAX reference ----------------------------

def reference(params, Q, K, V):
    def lin(x, w, bias):
        return x @ w.T + bias

    B, S, D = Q.shape

    def split_heads(x):
        return x.reshape(B, S, NUM_HEADS, D_K).transpose(0, 2, 1, 3)

    q = split_heads(lin(Q, params["wq"], params["bq"]))
    k = split_heads(lin(K, params["wk"], params["bk"]))
    v = split_heads(lin(V, params["wv"], params["bv"]))

    s = jnp.einsum("bhqd,bhkd->bhqk", q, k) / math.sqrt(D_K)
    p = jax.nn.softmax(s, axis=-1)
    o = jnp.einsum("bhqk,bhkd->bhqd", p, v)
    combined = o.transpose(0, 2, 1, 3).reshape(B, S, D)
    return lin(combined, params["wo"], params["bo"])


if __name__ == "__main__":
    key = jax.random.PRNGKey(0)
    kp, kq, kk, kv = jax.random.split(key, 4)

    B, S = 2, 8
    params = init_params(kp)
    Q = jax.random.normal(kq, (B, S, D_MODEL), jnp.float32)
    K = jax.random.normal(kk, (B, S, D_MODEL), jnp.float32)
    V = jax.random.normal(kv, (B, S, D_MODEL), jnp.float32)

    out = multi_head_attention(params, Q, K, V)
    out = jax.block_until_ready(out)

    ref = reference(params, Q, K, V)
    assert out.shape == (B, S, D_MODEL)
    # bf16 MXU operands with f32 accumulation -> slightly looser tolerance.
    assert jnp.allclose(out, ref, atol=2e-2, rtol=2e-2), "mismatch vs reference"

    print("KERNEL_OK")
</pallas_src>

<mosaic_0001>
module attributes {stable_mosaic.version = 11 : i64} {
  func.func @_qkv_proj_kernel(%arg0: i32, %arg1: memref<16x512xf32, #tpu.memory_space<vmem>>, %arg2: memref<16x512xf32, #tpu.memory_space<vmem>>, %arg3: memref<16x512xf32, #tpu.memory_space<vmem>>, %arg4: memref<3x512x512xbf16, #tpu.memory_space<vmem>>, %arg5: memref<3x1x512xf32, #tpu.memory_space<vmem>>, %arg6: memref<3x16x512xbf16, #tpu.memory_space<vmem>>) attributes {dimension_semantics = [#tpu.dimension_semantics<parallel>], iteration_bounds = array<i64: 1>, scalar_prefetch = 0 : i64, scratch_operands = 0 : i64, tpu.core_type = #tpu.core_type<tc>, window_params = [{transform_indices = @transform_0, window_bounds = array<i64: 16, 512>}, {transform_indices = @transform_1, window_bounds = array<i64: 16, 512>}, {transform_indices = @transform_2, window_bounds = array<i64: 16, 512>}, {pipeline_mode = #tpu.pipeline_mode<synchronous>, transform_indices = @transform_3, window_bounds = array<i64: 3, 512, 512>}, {pipeline_mode = #tpu.pipeline_mode<synchronous>, transform_indices = @transform_4, window_bounds = array<i64: 3, 1, 512>}, {transform_indices = @transform_5, window_bounds = array<i64: 3, 16, 512>}]} {
    %c0 = arith.constant 0 : index
    %c0_0 = arith.constant 0 : index
    %0 = vector.load %arg1[%c0, %c0_0] : memref<16x512xf32, #tpu.memory_space<vmem>>, vector<16x512xf32>
    %1 = arith.truncf %0 : vector<16x512xf32> to vector<16x512xbf16>
    %c0_1 = arith.constant 0 : index
    %c0_2 = arith.constant 0 : index
    %2 = vector.load %arg2[%c0_1, %c0_2] : memref<16x512xf32, #tpu.memory_space<vmem>>, vector<16x512xf32>
    %3 = arith.truncf %2 : vector<16x512xf32> to vector<16x512xbf16>
    %c0_3 = arith.constant 0 : index
    %c0_4 = arith.constant 0 : index
    %4 = vector.load %arg3[%c0_3, %c0_4] : memref<16x512xf32, #tpu.memory_space<vmem>>, vector<16x512xf32>
    %5 = arith.truncf %4 : vector<16x512xf32> to vector<16x512xbf16>
    %c0_5 = arith.constant 0 : index
    %c0_6 = arith.constant 0 : index
    %c0_7 = arith.constant 0 : index
    %6 = vector.load %arg4[%c0_5, %c0_6, %c0_7] : memref<3x512x512xbf16, #tpu.memory_space<vmem>>, vector<1x512x512xbf16>
    %7 = vector.shape_cast %6 : vector<1x512x512xbf16> to vector<512x512xbf16>
    %cst = arith.constant dense<0.000000e+00> : vector<16x512xf32>
    %8 = tpu.matmul %1, %7, %cst {dimension_numbers = #tpu.dot_dimension_numbers<[1], [0], [0], [1], [0, 0, 1, 1], [], []>} : vector<16x512xbf16>, vector<512x512xbf16>, vector<16x512xf32> -> vector<16x512xf32>
    %c0_8 = arith.constant 0 : index
    %c0_9 = arith.constant 0 : index
    %c0_10 = arith.constant 0 : index
    %9 = vector.load %arg5[%c0_8, %c0_9, %c0_10] : memref<3x1x512xf32, #tpu.memory_space<vmem>>, vector<1x1x512xf32>
    %10 = vector.shape_cast %9 : vector<1x1x512xf32> to vector<1x512xf32>
    %11 = vector.broadcast %10 : vector<1x512xf32> to vector<16x512xf32>
    %12 = arith.addf %8, %11 : vector<16x512xf32>
    %13 = arith.truncf %12 : vector<16x512xf32> to vector<16x512xbf16>
    %c0_11 = arith.constant 0 : index
    %c0_12 = arith.constant 0 : index
    %c0_13 = arith.constant 0 : index
    %14 = vector.load %arg6[%c0_11, %c0_12, %c0_13] : memref<3x16x512xbf16, #tpu.memory_space<vmem>>, vector<1x16x512xbf16>
    %15 = vector.shape_cast %14 : vector<1x16x512xbf16> to vector<16x512xbf16>
    %16 = vector.shape_cast %13 : vector<16x512xbf16> to vector<1x16x512xbf16>
    tpu.vector_store %arg6[%c0_11, %c0_12, %c0_13], %16 {strides = array<i32>} : memref<3x16x512xbf16, #tpu.memory_space<vmem>>, vector<1x16x512xbf16>,
    %c1 = arith.constant 1 : index
    %c0_14 = arith.constant 0 : index
    %c0_15 = arith.constant 0 : index
    %17 = vector.load %arg4[%c1, %c0_14, %c0_15] : memref<3x512x512xbf16, #tpu.memory_space<vmem>>, vector<1x512x512xbf16>
    %18 = vector.shape_cast %17 : vector<1x512x512xbf16> to vector<512x512xbf16>
    %cst_16 = arith.constant dense<0.000000e+00> : vector<16x512xf32>
    %19 = tpu.matmul %3, %18, %cst_16 {dimension_numbers = #tpu.dot_dimension_numbers<[1], [0], [0], [1], [0, 0, 1, 1], [], []>} : vector<16x512xbf16>, vector<512x512xbf16>, vector<16x512xf32> -> vector<16x512xf32>
    %c1_17 = arith.constant 1 : index
    %c0_18 = arith.constant 0 : index
    %c0_19 = arith.constant 0 : index
    %20 = vector.load %arg5[%c1_17, %c0_18, %c0_19] : memref<3x1x512xf32, #tpu.memory_space<vmem>>, vector<1x1x512xf32>
    %21 = vector.shape_cast %20 : vector<1x1x512xf32> to vector<1x512xf32>
    %22 = vector.broadcast %21 : vector<1x512xf32> to vector<16x512xf32>
    %23 = arith.addf %19, %22 : vector<16x512xf32>
    %24 = arith.truncf %23 : vector<16x512xf32> to vector<16x512xbf16>
    %c1_20 = arith.constant 1 : index
    %c0_21 = arith.constant 0 : index
    %c0_22 = arith.constant 0 : index
    %25 = vector.load %arg6[%c1_20, %c0_21, %c0_22] : memref<3x16x512xbf16, #tpu.memory_space<vmem>>, vector<1x16x512xbf16>
    %26 = vector.shape_cast %25 : vector<1x16x512xbf16> to vector<16x512xbf16>
    %27 = vector.shape_cast %24 : vector<16x512xbf16> to vector<1x16x512xbf16>
    tpu.vector_store %arg6[%c1_20, %c0_21, %c0_22], %27 {strides = array<i32>} : memref<3x16x512xbf16, #tpu.memory_space<vmem>>, vector<1x16x512xbf16>,
    %c2 = arith.constant 2 : index
    %c0_23 = arith.constant 0 : index
    %c0_24 = arith.constant 0 : index
    %28 = vector.load %arg4[%c2, %c0_23, %c0_24] : memref<3x512x512xbf16, #tpu.memory_space<vmem>>, vector<1x512x512xbf16>
    %29 = vector.shape_cast %28 : vector<1x512x512xbf16> to vector<512x512xbf16>
    %cst_25 = arith.constant dense<0.000000e+00> : vector<16x512xf32>
    %30 = tpu.matmul %5, %29, %cst_25 {dimension_numbers = #tpu.dot_dimension_numbers<[1], [0], [0], [1], [0, 0, 1, 1], [], []>} : vector<16x512xbf16>, vector<512x512xbf16>, vector<16x512xf32> -> vector<16x512xf32>
    %c2_26 = arith.constant 2 : index
    %c0_27 = arith.constant 0 : index
    %c0_28 = arith.constant 0 : index
    %31 = vector.load %arg5[%c2_26, %c0_27, %c0_28] : memref<3x1x512xf32, #tpu.memory_space<vmem>>, vector<1x1x512xf32>
    %32 = vector.shape_cast %31 : vector<1x1x512xf32> to vector<1x512xf32>
    %33 = vector.broadcast %32 : vector<1x512xf32> to vector<16x512xf32>
    %34 = arith.addf %30, %33 : vector<16x512xf32>
    %35 = arith.truncf %34 : vector<16x512xf32> to vector<16x512xbf16>
    %c2_29 = arith.constant 2 : index
    %c0_30 = arith.constant 0 : index
    %c0_31 = arith.constant 0 : index
    %36 = vector.load %arg6[%c2_29, %c0_30, %c0_31] : memref<3x16x512xbf16, #tpu.memory_space<vmem>>, vector<1x16x512xbf16>
    %37 = vector.shape_cast %36 : vector<1x16x512xbf16> to vector<16x512xbf16>
    %38 = vector.shape_cast %35 : vector<16x512xbf16> to vector<1x16x512xbf16>
    tpu.vector_store %arg6[%c2_29, %c0_30, %c0_31], %38 {strides = array<i32>} : memref<3x16x512xbf16, #tpu.memory_space<vmem>>, vector<1x16x512xbf16>,
    return
  }
  func.func @transform_0(%arg0: i32) -> (i32, i32) {
    %c0_i32 = arith.constant 0 : i32
    %c0_i32_0 = arith.constant 0 : i32
    return %arg0, %c0_i32 : i32, i32
  }
  func.func @transform_1(%arg0: i32) -> (i32, i32) {
    %c0_i32 = arith.constant 0 : i32
    %c0_i32_0 = arith.constant 0 : i32
    return %arg0, %c0_i32 : i32, i32
  }
  func.func @transform_2(%arg0: i32) -> (i32, i32) {
    %c0_i32 = arith.constant 0 : i32
    %c0_i32_0 = arith.constant 0 : i32
    return %arg0, %c0_i32 : i32, i32
  }
  func.func @transform_3(%arg0: i32) -> (i32, i32, i32) {
    %c0_i32 = arith.constant 0 : i32
    %c0_i32_0 = arith.constant 0 : i32
    %c0_i32_1 = arith.constant 0 : i32
    %c0_i32_2 = arith.constant 0 : i32
    return %c0_i32, %c0_i32_0, %c0_i32_1 : i32, i32, i32
  }
  func.func @transform_4(%arg0: i32) -> (i32, i32, i32) {
    %c0_i32 = arith.constant 0 : i32
    %c0_i32_0 = arith.constant 0 : i32
    %c0_i32_1 = arith.constant 0 : i32
    %c0_i32_2 = arith.constant 0 : i32
    return %c0_i32, %c0_i32_0, %c0_i32_1 : i32, i32, i32
  }
  func.func @transform_5(%arg0: i32) -> (i32, i32, i32) {
    %c0_i32 = arith.constant 0 : i32
    %c0_i32_0 = arith.constant 0 : i32
    %c0_i32_1 = arith.constant 0 : i32
    return %c0_i32, %arg0, %c0_i32_0 : i32, i32, i32
  }
}

</mosaic_0001>

<llo_original>
// kernel: tpu_custom_call.1
$region0: #{tpu_custom_call.1}
  #allocation0 [shape = 'u32[]', space=smem, size = 0x4, offset = 0x4, fixed_abs, tag = 'smem constant byte address 0x4 - core index']
  #allocation1 [shape = 'u32[144,128]{1,0:T(1,128)}', space=vmem, size = 0x12000, scoped, tag = 'internal scratch']
  %s0 = inlined_call_operand.hbm [shape: f32[16,512], index: 0, kind: input, shape index: {}]
  %s1 = inlined_call_operand.hbm [shape: f32[16,512], index: 1, kind: input, shape index: {}]
  %s2 = inlined_call_operand.hbm [shape: f32[16,512], index: 2, kind: input, shape index: {}]
  %s3 = inlined_call_operand.hbm [shape: bf16[3,512,512], index: 3, kind: input, shape index: {}]
  %s4 = inlined_call_operand.hbm [shape: f32[3,1,512], index: 4, kind: input, shape index: {}]
  %s5 = inlined_call_operand.hbm [shape: bf16[3,16,512], index: 5, kind: output, shape index: {}]
  %s6 = sld [smem:[#allocation0]]
  $region50: #{tpu_custom_call.1} parent=0
    _
  %s8 = ssub.s32 1, %s6
  %s9 = scalar_select 0, %s8, %s6
  $region1: #{tpu_custom_call.1} parent=0
    #allocation2 [shape = 'u8[32768]{0}', space=vmem, size = 0x8000, scoped, tag = 'input window, operand 0, single buffered']
    #allocation3 [shape = 's32[1]{0}', space=sflag, size = 0x4, scoped, tag = 'scoped memory for tpu_custom_call.1']
    #allocation4 [shape = 's32[1]{0}', space=sflag, size = 0x4, scoped, tag = 'scoped memory for tpu_custom_call.1']
    #allocation5 [shape = 'u8[32768]{0}', space=vmem, size = 0x8000, scoped, tag = 'input window, operand 1, single buffered']
    #allocation6 [shape = 's32[1]{0}', space=sflag, size = 0x4, scoped, tag = 'scoped memory for tpu_custom_call.1']
    #allocation7 [shape = 'u8[32768]{0}', space=vmem, size = 0x8000, scoped, tag = 'input window, operand 2, single buffered']
    #allocation8 [shape = 'u8[1572864]{0}', space=vmem, size = 0x180000, scoped, tag = 'input window, operand 3, single buffered']
    #allocation9 [shape = 's32[1]{0}', space=sflag, size = 0x4, scoped, tag = 'scoped memory for tpu_custom_call.1']
    #allocation10 [shape = 'u8[6144]{0}', space=vmem, size = 0x1800, scoped, tag = 'input window, operand 4, single buffered']
    #allocation11 [shape = 'u8[49152]{0}', space=vmem, size = 0xc000, scoped, tag = 'output window, operand 0, single buffered']
    %10 = vsyncpa [#allocation3], 0
    %11 = vsyncpa [#allocation6], 0
    %12 = vsyncpa [#allocation9], 0
    %13 = vsyncpa [#allocation4], 0
    // Predicated region
    $region2: #{tpu_custom_call.1} parent=1 // pred_check
      _
    $region3: #{tpu_custom_call.1} parent=1 // pred_check_branch
      %15 = sbr.rel (0) target = $region5
    $region4: #{tpu_custom_call.1} parent=1 // pred_region
      %s17 = ssub.s32 1024, 1024
      %18 = vsyncadd [#allocation3], %s17
      %s19 = sshll.u32 [#allocation2], 4
      %s20 = int_to_ptr.vmem [resolvable:$true] %s19
      %25 = dma.hbm_to_vmem [thread:$0]  %s0, 1024, %s20, [#allocation3], 512, 512, 32
    $region5: #{tpu_custom_call.1} parent=1 // pred_fallthru
      _
    // Predicated region
    $region6: #{tpu_custom_call.1} parent=1 // pred_check
      _
    $region7: #{tpu_custom_call.1} parent=1 // pred_check_branch
      %27 = sbr.rel (0) target = $region9
    $region8: #{tpu_custom_call.1} parent=1 // pred_region
      %s29 = ssub.s32 1024, 1024
      %30 = vsyncadd [#allocation6], %s29
      %s31 = sshll.u32 [#allocation5], 4
      %s32 = int_to_ptr.vmem [resolvable:$true] %s31
      %37 = dma.hbm_to_vmem [thread:$0]  %s1, 1024, %s32, [#allocation6], 512, 512, 32
    $region9: #{tpu_custom_call.1} parent=1 // pred_fallthru
      _
    // Predicated region
    $region10: #{tpu_custom_call.1} parent=1 // pred_check
      _
    $region11: #{tpu_custom_call.1} parent=1 // pred_check_branch
      %39 = sbr.rel (0) target = $region13
    $region12: #{tpu_custom_call.1} parent=1 // pred_region
      %s41 = ssub.s32 1024, 1024
      %42 = vsyncadd [#allocation6], %s41
      %s43 = sshll.u32 [#allocation7], 4
      %s44 = int_to_ptr.vmem [resolvable:$true] %s43
      %49 = dma.hbm_to_vmem [thread:$0]  %s2, 1024, %s44, [#allocation6], 512, 512, 32
    $region13: #{tpu_custom_call.1} parent=1 // pred_fallthru
      _
    // Predicated region
    $region14: #{tpu_custom_call.1} parent=1 // pred_check
      _
    $region15: #{tpu_custom_call.1} parent=1 // pred_check_branch
      %51 = sbr.rel (0) target = $region17
    $region16: #{tpu_custom_call.1} parent=1 // pred_region
      %s53 = ssub.s32 49152, 49152
      %54 = vsyncadd [#allocation9], %s53
      %s55 = sshll.u32 [#allocation8], 4
      %s56 = int_to_ptr.vmem [resolvable:$true] %s55
      %61 = dma.hbm_to_vmem [thread:$0]  %s3, 49152, %s56, [#allocation9], 256, 256, 16
    $region17: #{tpu_custom_call.1} parent=1 // pred_fallthru
      _
    // Predicated region
    $region18: #{tpu_custom_call.1} parent=1 // pred_check
      _
    $region19: #{tpu_custom_call.1} parent=1 // pred_check_branch
      %63 = sbr.rel (0) target = $region21
    $region20: #{tpu_custom_call.1} parent=1 // pred_region
      %s65 = ssub.s32 192, 192
      %66 = vsyncadd [#allocation9], %s65
      %s67 = sshll.u32 [#allocation10], 4
      %s68 = int_to_ptr.vmem [resolvable:$true] %s67
      %73 = dma.hbm_to_vmem [thread:$0]  %s4, 192, %s68, [#allocation9], 64, 64, 4
    $region21: #{tpu_custom_call.1} parent=1 // pred_fallthru
      _
    // Predicated region
    $region22: #{tpu_custom_call.1} parent=1 // pred_check
      _
    $region23: #{tpu_custom_call.1} parent=1 // pred_check_branch
      %75 = sbr.rel (0) target = $region25
    $region24: #{tpu_custom_call.1} parent=1 // pred_region
      %76 = dma.done [#allocation3], 1024
    $region25: #{tpu_custom_call.1} parent=1 // pred_fallthru
      _
    // Predicated region
    $region26: #{tpu_custom_call.1} parent=1 // pred_check
      _
    $region27: #{tpu_custom_call.1} parent=1 // pred_check_branch
      %78 = sbr.rel (0) target = $region29
    $region28: #{tpu_custom_call.1} parent=1 // pred_region
      %79 = dma.done [#allocation6], 1024
    $region29: #{tpu_custom_call.1} parent=1 // pred_fallthru
      _
    // Predicated region
    $region30: #{tpu_custom_call.1} parent=1 // pred_check
      _
    $region31: #{tpu_custom_call.1} parent=1 // pred_check_branch
      %81 = sbr.rel (0) target = $region33
    $region32: #{tpu_custom_call.1} parent=1 // pred_region
      %82 = dma.done [#allocation6], 1024
    $region33: #{tpu_custom_call.1} parent=1 // pred_fallthru
      _
    // Predicated region
    $region34: #{tpu_custom_call.1} parent=1 // pred_check
      _
    $region35: #{tpu_custom_call.1} parent=1 // pred_check_branch
      %84 = sbr.rel (0) target = $region37
    $region36: #{tpu_custom_call.1} parent=1 // pred_region
      %85 = dma.done [#allocation9], 49152
    $region37: #{tpu_custom_call.1} parent=1 // pred_fallthru
      _
    // Predicated region
    $region38: #{tpu_custom_call.1} parent=1 // pred_check
      _
    $region39: #{tpu_custom_call.1} parent=1 // pred_check_branch
      %87 = sbr.rel (0) target = $region41
    $region40: #{tpu_custom_call.1} parent=1 // pred_region
      %88 = dma.done [#allocation9], 192
    $region41: #{tpu_custom_call.1} parent=1 // pred_fallthru
      _
    %v89 = vld [vmem:[#allocation2] sm:$0xff]
    %v90 = vld [vmem:[#allocation2 + $0x8] sm:$0xff]
    %v91 = vld [vmem:[#allocation2 + $0x10] sm:$0xff]
    %v92 = vld [vmem:[#allocation2 + $0x18] sm:$0xff]
    %v93 = vld [vmem:[#allocation2 + $0x20] sm:$0xff]
    %v94 = vld [vmem:[#allocation2 + $0x28] sm:$0xff]
    %v95 = vld [vmem:[#allocation2 + $0x30] sm:$0xff]
    %v96 = vld [vmem:[#allocation2 + $0x38] sm:$0xff]
    %v97 = vpack.c.bf16 %v93, %v89
    %v98 = vpack.c.bf16 %v94, %v90
    %v99 = vpack.c.bf16 %v95, %v91
    %v100 = vpack.c.bf16 %v96, %v92
    %v101 = vld [vmem:[#allocation5] sm:$0xff]
    %v102 = vld [vmem:[#allocation5 + $0x8] sm:$0xff]
    %v103 = vld [vmem:[#allocation5 + $0x10] sm:$0xff]
    %v104 = vld [vmem:[#allocation5 + $0x18] sm:$0xff]
    %v105 = vld [vmem:[#allocation5 + $0x20] sm:$0xff]
    %v106 = vld [vmem:[#allocation5 + $0x28] sm:$0xff]
    %v107 = vld [vmem:[#allocation5 + $0x30] sm:$0xff]
    %v108 = vld [vmem:[#allocation5 + $0x38] sm:$0xff]
    %v109 = vpack.c.bf16 %v105, %v101
    %v110 = vpack.c.bf16 %v106, %v102
    %v111 = vpack.c.bf16 %v107, %v103
    %v112 = vpack.c.bf16 %v108, %v104
    %v113 = vld [vmem:[#allocation7] sm:$0xff]
    %v114 = vld [vmem:[#allocation7 + $0x8] sm:$0xff]
    %v115 = vld [vmem:[#allocation7 + $0x10] sm:$0xff]
    %v116 = vld [vmem:[#allocation7 + $0x18] sm:$0xff]
    %v117 = vld [vmem:[#allocation7 + $0x20] sm:$0xff]
    %v118 = vld [vmem:[#allocation7 + $0x28] sm:$0xff]
    %v119 = vld [vmem:[#allocation7 + $0x30] sm:$0xff]
    %v120 = vld [vmem:[#allocation7 + $0x38] sm:$0xff]
    %v121 = vpack.c.bf16 %v117, %v113
    %v122 = vpack.c.bf16 %v118, %v114
    %v123 = vpack.c.bf16 %v119, %v115
    %v124 = vpack.c.bf16 %v120, %v116
    %v125 = vld [vmem:[#allocation8] sm:$0xff]
    %v126 = vld [vmem:[#allocation8 + $0x8] sm:$0xff]
    %v127 = vld [vmem:[#allocation8 + $0x10] sm:$0xff]
    %v128 = vld [vmem:[#allocation8 + $0x18] sm:$0xff]
    %v129 = vld [vmem:[#allocation8 + $0x20] sm:$0xff]
    %v130 = vld [vmem:[#allocation8 + $0x28] sm:$0xff]
    %v131 = vld [vmem:[#allocation8 + $0x30] sm:$0xff]
    %v132 = vld [vmem:[#allocation8 + $0x38] sm:$0xff]
    %v133 = vld [vmem:[#allocation8 + $0x40] sm:$0xff]
    %v134 = vld [vmem:[#allocation8 + $0x48] sm:$0xff]
    %v135 = vld [vmem:[#allocation8 + $0x50] sm:$0xff]
    %v136 = vld [vmem:[#allocation8 + $0x58] sm:$0xff]
    %v137 = vld [vmem:[#allocation8 + $0x60] sm:$0xff]
    %v138 = vld [vmem:[#allocation8 + $0x68] sm:$0xff]
    %v139 = vld [vmem:[#allocation8 + $0x70] sm:$0xff]
    %v140 = vld [vmem:[#allocation8 + $0x78] sm:$0xff]
    %v141 = vld [vmem:[#allocation8 + $0x80] sm:$0xff]
    %v142 = vld [vmem:[#allocation8 + $0x88] sm:$0xff]
    %v143 = vld [vmem:[#allocation8 + $0x90] sm:$0xff]
    %v144 = vld [vmem:[#allocation8 + $0x98] sm:$0xff]
    %v145 = vld [vmem:[#allocation8 + $0xa0] sm:$0xff]
    %v146 = vld [vmem:[#allocation8 + $0xa8] sm:$0xff]
    %v147 = vld [vmem:[#allocation8 + $0xb0] sm:$0xff]
    %v148 = vld [vmem:[#allocation8 + $0xb8] sm:$0xff]
    %v149 = vld [vmem:[#allocation8 + $0xc0] sm:$0xff]
    %v150 = vld [vmem:[#allocation8 + $0xc8] sm:$0xff]
    %v151 = vld [vmem:[#allocation8 + $0xd0] sm:$0xff]
    %v152 = vld [vmem:[#allocation8 + $0xd8] sm:$0xff]
    %v153 = vld [vmem:[#allocation8 + $0xe0] sm:$0xff]
    %v154 = vld [vmem:[#allocation8 + $0xe8] sm:$0xff]
    %v155 = vld [vmem:[#allocation8 + $0xf0] sm:$0xff]
    %v156 = vld [vmem:[#allocation8 + $0xf8] sm:$0xff]
    %v157 = vld [vmem:[#allocation8 + $0x100] sm:$0xff]
    %v158 = vld [vmem:[#allocation8 + $0x108] sm:$0xff]
    %v159 = vld [vmem:[#allocation8 + $0x110] sm:$0xff]
    %v160 = vld [vmem:[#allocation8 + $0x118] sm:$0xff]
    %v161 = vld [vmem:[#allocation8 + $0x120] sm:$0xff]
    %v162 = vld [vmem:[#allocation8 + $0x128] sm:$0xff]
    %v163 = vld [vmem:[#allocation8 + $0x130] sm:$0xff]
    %v164 = vld [vmem:[#allocation8 + $0x138] sm:$0xff]
    %v165 = vld [vmem:[#allocation8 + $0x140] sm:$0xff]
    %v166 = vld [vmem:[#allocation8 + $0x148] sm:$0xff]
    %v167 = vld [vmem:[#allocation8 + $0x150] sm:$0xff]
    %v168 = vld [vmem:[#allocation8 + $0x158] sm:$0xff]
    %v169 = vld [vmem:[#allocation8 + $0x160] sm:$0xff]
    %v170 = vld [vmem:[#allocation8 + $0x168] sm:$0xff]
    %v171 = vld [vmem:[#allocation8 + $0x170] sm:$0xff]
    %v172 = vld [vmem:[#allocation8 + $0x178] sm:$0xff]
    %v173 = vld [vmem:[#allocation8 + $0x180] sm:$0xff]
    %v174 = vld [vmem:[#allocation8 + $0x188] sm:$0xff]
    %v175 = vld [vmem:[#allocation8 + $0x190] sm:$0xff]
    %v176 = vld [vmem:[#allocation8 + $0x198] sm:$0xff]
    %v177 = vld [vmem:[#allocation8 + $0x1a0] sm:$0xff]
    %v178 = vld [vmem:[#allocation8 + $0x1a8] sm:$0xff]
    %v179 = vld [vmem:[#allocation8 + $0x1b0] sm:$0xff]
    %v180 = vld [vmem:[#allocation8 + $0x1b8] sm:$0xff]
    %v181 = vld [vmem:[#allocation8 + $0x1c0] sm:$0xff]
    %v182 = vld [vmem:[#allocation8 + $0x1c8] sm:$0xff]
    %v183 = vld [vmem:[#allocation8 + $0x1d0] sm:$0xff]
    %v184 = vld [vmem:[#allocation8 + $0x1d8] sm:$0xff]
    %v185 = vld [vmem:[#allocation8 + $0x1e0] sm:$0xff]
    %v186 = vld [vmem:[#allocation8 + $0x1e8] sm:$0xff]
    %v187 = vld [vmem:[#allocation8 + $0x1f0] sm:$0xff]
    %v188 = vld [vmem:[#allocation8 + $0x1f8] sm:$0xff]
    %v189 = vld [vmem:[#allocation8 + $0x200] sm:$0xff]
    %v190 = vld [vmem:[#allocation8 + $0x208] sm:$0xff]
    %v191 = vld [vmem:[#allocation8 + $0x210] sm:$0xff]
    %v192 = vld [vmem:[#allocation8 + $0x218] sm:$0xff]
    %v193 = vld [vmem:[#allocation8 + $0x220] sm:$0xff]
    %v194 = vld [vmem:[#allocation8 + $0x228] sm:$0xff]
    %v195 = vld [vmem:[#allocation8 + $0x230] sm:$0xff]
    %v196 = vld [vmem:[#allocation8 + $0x238] sm:$0xff]
    %v197 = vld [vmem:[#allocation8 + $0x240] sm:$0xff]
    %v198 = vld [vmem:[#allocation8 + $0x248] sm:$0xff]
    %v199 = vld [vmem:[#allocation8 + $0x250] sm:$0xff]
    %v200 = vld [vmem:[#allocation8 + $0x258] sm:$0xff]
    %v201 = vld [vmem:[#allocation8 + $0x260] sm:$0xff]
    %v202 = vld [vmem:[#allocation8 + $0x268] sm:$0xff]
    %v203 = vld [vmem:[#allocation8 + $0x270] sm:$0xff]
    %v204 = vld [vmem:[#allocation8 + $0x278] sm:$0xff]
    %v205 = vld [vmem:[#allocation8 + $0x280] sm:$0xff]
    %v206 = vld [vmem:[#allocation8 + $0x288] sm:$0xff]
    %v207 = vld [vmem:[#allocation8 + $0x290] sm:$0xff]
    %v208 = vld [vmem:[#allocation8 + $0x298] sm:$0xff]
    %v209 = vld [vmem:[#allocation8 + $0x2a0] sm:$0xff]
    %v210 = vld [vmem:[#allocation8 + $0x2a8] sm:$0xff]
    %v211 = vld [vmem:[#allocation8 + $0x2b0] sm:$0xff]
    %v212 = vld [vmem:[#allocation8 + $0x2b8] sm:$0xff]
    %v213 = vld [vmem:[#allocation8 + $0x2c0] sm:$0xff]
    %v214 = vld [vmem:[#allocation8 + $0x2c8] sm:$0xff]
    %v215 = vld [vmem:[#allocation8 + $0x2d0] sm:$0xff]
    %v216 = vld [vmem:[#allocation8 + $0x2d8] sm:$0xff]
    %v217 = vld [vmem:[#allocation8 + $0x2e0] sm:$0xff]
    %v218 = vld [vmem:[#allocation8 + $0x2e8] sm:$0xff]
    %v219 = vld [vmem:[#allocation8 + $0x2f0] sm:$0xff]
    %v220 = vld [vmem:[#allocation8 + $0x2f8] sm:$0xff]
    %v221 = vld [vmem:[#allocation8 + $0x300] sm:$0xff]
    %v222 = vld [vmem:[#allocation8 + $0x308] sm:$0xff]
    %v223 = vld [vmem:[#allocation8 + $0x310] sm:$0xff]
    %v224 = vld [vmem:[#allocation8 + $0x318] sm:$0xff]
    %v225 = vld [vmem:[#allocation8 + $0x320] sm:$0xff]
    %v226 = vld [vmem:[#allocation8 + $0x328] sm:$0xff]
    %v227 = vld [vmem:[#allocation8 + $0x330] sm:$0xff]
    %v228 = vld [vmem:[#allocation8 + $0x338] sm:$0xff]
    %v229 = vld [vmem:[#allocation8 + $0x340] sm:$0xff]
    %v230 = vld [vmem:[#allocation8 + $0x348] sm:$0xff]
    %v231 = vld [vmem:[#allocation8 + $0x350] sm:$0xff]
    %v232 = vld [vmem:[#allocation8 + $0x358] sm:$0xff]
    %v233 = vld [vmem:[#allocation8 + $0x360] sm:$0xff]
    %v234 = vld [vmem:[#allocation8 + $0x368] sm:$0xff]
    %v235 = vld [vmem:[#allocation8 + $0x370] sm:$0xff]
    %v236 = vld [vmem:[#allocation8 + $0x378] sm:$0xff]
    %v237 = vld [vmem:[#allocation8 + $0x380] sm:$0xff]
    %v238 = vld [vmem:[#allocation8 + $0x388] sm:$0xff]
    %v239 = vld [vmem:[#allocation8 + $0x390] sm:$0xff]
    %v240 = vld [vmem:[#allocation8 + $0x398] sm:$0xff]
    %v241 = vld [vmem:[#allocation8 + $0x3a0] sm:$0xff]
    %v242 = vld [vmem:[#allocation8 + $0x3a8] sm:$0xff]
    %v243 = vld [vmem:[#allocation8 + $0x3b0] sm:$0xff]
    %v244 = vld [vmem:[#allocation8 + $0x3b8] sm:$0xff]
    %v245 = vld [vmem:[#allocation8 + $0x3c0] sm:$0xff]
    %v246 = vld [vmem:[#allocation8 + $0x3c8] sm:$0xff]
    %v247 = vld [vmem:[#allocation8 + $0x3d0] sm:$0xff]
    %v248 = vld [vmem:[#allocation8 + $0x3d8] sm:$0xff]
    %v249 = vld [vmem:[#allocation8 + $0x3e0] sm:$0xff]
    %v250 = vld [vmem:[#allocation8 + $0x3e8] sm:$0xff]
    %v251 = vld [vmem:[#allocation8 + $0x3f0] sm:$0xff]
    %v252 = vld [vmem:[#allocation8 + $0x3f8] sm:$0xff]
    %v253 = vld [vmem:[#allocation10] sm:$0xf]
    %v255 = vlaneseq
    %v256 = vshrl.u32 %v255, 7
    %v257 = vsub.s32 0, %v256
    %v258 = vrot.slane %v253, %v257
    %v259 = vlaneseq
    %v260 = vshrl.u32 %v259, 7
    %v261 = vsub.s32 1, %v260
    %v262 = vrot.slane %v253, %v261
    %v263 = vlaneseq
    %v264 = vshrl.u32 %v263, 7
    %v265 = vsub.s32 2, %v264
    %v266 = vrot.slane %v253, %v265
    %v267 = vlaneseq
    %v268 = vshrl.u32 %v267, 7
    %v269 = vsub.s32 3, %v268
    %v270 = vrot.slane %v253, %v269
    %v403 = vunpack.c.l.b16 %v125
    %v404 = vunpack.c.h.b16 %v125
    %v405 = vunpack.c.l.b16 %v126
    %v406 = vunpack.c.h.b16 %v126
    %v407 = vunpack.c.l.b16 %v127
    %v408 = vunpack.c.h.b16 %v127
    %v409 = vunpack.c.l.b16 %v128
    %v410 = vunpack.c.h.b16 %v128
    %v411 = vunpack.c.l.b16 %v129
    %v412 = vunpack.c.h.b16 %v129
    %v413 = vunpack.c.l.b16 %v130
    %v414 = vunpack.c.h.b16 %v130
    %v415 = vunpack.c.l.b16 %v131
    %v416 = vunpack.c.h.b16 %v131
    %v417 = vunpack.c.l.b16 %v132
    %v418 = vunpack.c.h.b16 %v132
    %v419 = vunpack.c.l.b16 %v133
    %v420 = vunpack.c.h.b16 %v133
    %v421 = vunpack.c.l.b16 %v134
    %v422 = vunpack.c.h.b16 %v134
    %v423 = vunpack.c.l.b16 %v135
    %v424 = vunpack.c.h.b16 %v135
    %v425 = vunpack.c.l.b16 %v136
    %v426 = vunpack.c.h.b16 %v136
    %v427 = vunpack.c.l.b16 %v137
    %v428 = vunpack.c.h.b16 %v137
    %v429 = vunpack.c.l.b16 %v138
    %v430 = vunpack.c.h.b16 %v138
    %v431 = vunpack.c.l.b16 %v139
    %v432 = vunpack.c.h.b16 %v139
    %v433 = vunpack.c.l.b16 %v140
    %v434 = vunpack.c.h.b16 %v140
    %v435 = vunpack.c.l.b16 %v141
    %v436 = vunpack.c.h.b16 %v141
    %v437 = vunpack.c.l.b16 %v142
    %v438 = vunpack.c.h.b16 %v142
    %v439 = vunpack.c.l.b16 %v143
    %v440 = vunpack.c.h.b16 %v143
    %v441 = vunpack.c.l.b16 %v144
    %v442 = vunpack.c.h.b16 %v144
    %v443 = vunpack.c.l.b16 %v145
    %v444 = vunpack.c.h.b16 %v145
    %v445 = vunpack.c.l.b16 %v146
    %v446 = vunpack.c.h.b16 %v146
    %v447 = vunpack.c.l.b16 %v147
    %v448 = vunpack.c.h.b16 %v147
    %v449 = vunpack.c.l.b16 %v148
    %v450 = vunpack.c.h.b16 %v148
    %v451 = vunpack.c.l.b16 %v149
    %v452 = vunpack.c.h.b16 %v149
    %v453 = vunpack.c.l.b16 %v150
    %v454 = vunpack.c.h.b16 %v150
    %v455 = vunpack.c.l.b16 %v151
    %v456 = vunpack.c.h.b16 %v151
    %v457 = vunpack.c.l.b16 %v152
    %v458 = vunpack.c.h.b16 %v152
    %v459 = vunpack.c.l.b16 %v153
    %v460 = vunpack.c.h.b16 %v153
    %v461 = vunpack.c.l.b16 %v154
    %v462 = vunpack.c.h.b16 %v154
    %v463 = vunpack.c.l.b16 %v155
    %v464 = vunpack.c.h.b16 %v155
    %v465 = vunpack.c.l.b16 %v156
    %v466 = vunpack.c.h.b16 %v156
    %v467 = vunpack.c.l.b16 %v157
    %v468 = vunpack.c.h.b16 %v157
    %v469 = vunpack.c.l.b16 %v158
    %v470 = vunpack.c.h.b16 %v158
    %v471 = vunpack.c.l.b16 %v159
    %v472 = vunpack.c.h.b16 %v159
    %v473 = vunpack.c.l.b16 %v160
    %v474 = vunpack.c.h.b16 %v160
    %v475 = vunpack.c.l.b16 %v161
    %v476 = vunpack.c.h.b16 %v161
    %v477 = vunpack.c.l.b16 %v162
    %v478 = vunpack.c.h.b16 %v162
    %v479 = vunpack.c.l.b16 %v163
    %v480 = vunpack.c.h.b16 %v163
    %v481 = vunpack.c.l.b16 %v164
    %v482 = vunpack.c.h.b16 %v164
    %v483 = vunpack.c.l.b16 %v165
    %v484 = vunpack.c.h.b16 %v165
    %v485 = vunpack.c.l.b16 %v166
    %v486 = vunpack.c.h.b16 %v166
    %v487 = vunpack.c.l.b16 %v167
    %v488 = vunpack.c.h.b16 %v167
    %v489 = vunpack.c.l.b16 %v168
    %v490 = vunpack.c.h.b16 %v168
    %v491 = vunpack.c.l.b16 %v169
    %v492 = vunpack.c.h.b16 %v169
    %v493 = vunpack.c.l.b16 %v170
    %v494 = vunpack.c.h.b16 %v170
    %v495 = vunpack.c.l.b16 %v171
    %v496 = vunpack.c.h.b16 %v171
    %v497 = vunpack.c.l.b16 %v172
    %v498 = vunpack.c.h.b16 %v172
    %v499 = vunpack.c.l.b16 %v173
    %v500 = vunpack.c.h.b16 %v173
    %v501 = vunpack.c.l.b16 %v174
    %v502 = vunpack.c.h.b16 %v174
    %v503 = vunpack.c.l.b16 %v175
    %v504 = vunpack.c.h.b16 %v175
    %v505 = vunpack.c.l.b16 %v176
    %v506 = vunpack.c.h.b16 %v176
    %v507 = vunpack.c.l.b16 %v177
    %v508 = vunpack.c.h.b16 %v177
    %v509 = vunpack.c.l.b16 %v178
    %v510 = vunpack.c.h.b16 %v178
    %v511 = vunpack.c.l.b16 %v179
    %v512 = vunpack.c.h.b16 %v179
    %v513 = vunpack.c.l.b16 %v180
    %v514 = vunpack.c.h.b16 %v180
    %v515 = vunpack.c.l.b16 %v181
    %v516 = vunpack.c.h.b16 %v181
    %v517 = vunpack.c.l.b16 %v182
    %v518 = vunpack.c.h.b16 %v182
    %v519 = vunpack.c.l.b16 %v183
    %v520 = vunpack.c.h.b16 %v183
    %v521 = vunpack.c.l.b16 %v184
    %v522 = vunpack.c.h.b16 %v184
    %v523 = vunpack.c.l.b16 %v185
    %v524 = vunpack.c.h.b16 %v185
    %v525 = vunpack.c.l.b16 %v186
    %v526 = vunpack.c.h.b16 %v186
    %v527 = vunpack.c.l.b16 %v187
    %v528 = vunpack.c.h.b16 %v187
    %v529 = vunpack.c.l.b16 %v188
    %v530 = vunpack.c.h.b16 %v188
    %v531 = vunpack.c.l.b16 %v189
    %v532 = vunpack.c.h.b16 %v189
    %v533 = vunpack.c.l.b16 %v190
    %v534 = vunpack.c.h.b16 %v190
    %v535 = vunpack.c.l.b16 %v191
    %v536 = vunpack.c.h.b16 %v191
    %v537 = vunpack.c.l.b16 %v192
    %v538 = vunpack.c.h.b16 %v192
    %v539 = vunpack.c.l.b16 %v193
    %v540 = vunpack.c.h.b16 %v193
    %v541 = vunpack.c.l.b16 %v194
    %v542 = vunpack.c.h.b16 %v194
    %v543 = vunpack.c.l.b16 %v195
    %v544 = vunpack.c.h.b16 %v195
    %v545 = vunpack.c.l.b16 %v196
    %v546 = vunpack.c.h.b16 %v196
    %v547 = vunpack.c.l.b16 %v197
    %v548 = vunpack.c.h.b16 %v197
    %v549 = vunpack.c.l.b16 %v198
    %v550 = vunpack.c.h.b16 %v198
    %v551 = vunpack.c.l.b16 %v199
    %v552 = vunpack.c.h.b16 %v199
    %v553 = vunpack.c.l.b16 %v200
    %v554 = vunpack.c.h.b16 %v200
    %v555 = vunpack.c.l.b16 %v201
    %v556 = vunpack.c.h.b16 %v201
    %v557 = vunpack.c.l.b16 %v202
    %v558 = vunpack.c.h.b16 %v202
    %v559 = vunpack.c.l.b16 %v203
    %v560 = vunpack.c.h.b16 %v203
    %v561 = vunpack.c.l.b16 %v204
    %v562 = vunpack.c.h.b16 %v204
    %v563 = vunpack.c.l.b16 %v205
    %v564 = vunpack.c.h.b16 %v205
    %v565 = vunpack.c.l.b16 %v206
    %v566 = vunpack.c.h.b16 %v206
    %v567 = vunpack.c.l.b16 %v207
    %v568 = vunpack.c.h.b16 %v207
    %v569 = vunpack.c.l.b16 %v208
    %v570 = vunpack.c.h.b16 %v208
    %v571 = vunpack.c.l.b16 %v209
    %v572 = vunpack.c.h.b16 %v209
    %v573 = vunpack.c.l.b16 %v210
    %v574 = vunpack.c.h.b16 %v210
    %v575 = vunpack.c.l.b16 %v211
    %v576 = vunpack.c.h.b16 %v211
    %v577 = vunpack.c.l.b16 %v212
    %v578 = vunpack.c.h.b16 %v212
    %v579 = vunpack.c.l.b16 %v213
    %v580 = vunpack.c.h.b16 %v213
    %v581 = vunpack.c.l.b16 %v214
    %v582 = vunpack.c.h.b16 %v214
    %v583 = vunpack.c.l.b16 %v215
    %v584 = vunpack.c.h.b16 %v215
    %v585 = vunpack.c.l.b16 %v216
    %v586 = vunpack.c.h.b16 %v216
    %v587 = vunpack.c.l.b16 %v217
    %v588 = vunpack.c.h.b16 %v217
    %v589 = vunpack.c.l.b16 %v218
    %v590 = vunpack.c.h.b16 %v218
    %v591 = vunpack.c.l.b16 %v219
    %v592 = vunpack.c.h.b16 %v219
    %v593 = vunpack.c.l.b16 %v220
    %v594 = vunpack.c.h.b16 %v220
    %v595 = vunpack.c.l.b16 %v221
    %v596 = vunpack.c.h.b16 %v221
    %v597 = vunpack.c.l.b16 %v222
    %v598 = vunpack.c.h.b16 %v222
    %v599 = vunpack.c.l.b16 %v223
    %v600 = vunpack.c.h.b16 %v223
    %v601 = vunpack.c.l.b16 %v224
    %v602 = vunpack.c.h.b16 %v224
    %v603 = vunpack.c.l.b16 %v225
    %v604 = vunpack.c.h.b16 %v225
    %v605 = vunpack.c.l.b16 %v226
    %v606 = vunpack.c.h.b16 %v226
    %v607 = vunpack.c.l.b16 %v227
    %v608 = vunpack.c.h.b16 %v227
    %v609 = vunpack.c.l.b16 %v228
    %v610 = vunpack.c.h.b16 %v228
    %v611 = vunpack.c.l.b16 %v229
    %v612 = vunpack.c.h.b16 %v229
    %v613 = vunpack.c.l.b16 %v230
    %v614 = vunpack.c.h.b16 %v230
    %v615 = vunpack.c.l.b16 %v231
    %v616 = vunpack.c.h.b16 %v231
    %v617 = vunpack.c.l.b16 %v232
    %v618 = vunpack.c.h.b16 %v232
    %v619 = vunpack.c.l.b16 %v233
    %v620 = vunpack.c.h.b16 %v233
    %v621 = vunpack.c.l.b16 %v234
    %v622 = vunpack.c.h.b16 %v234
    %v623 = vunpack.c.l.b16 %v235
    %v624 = vunpack.c.h.b16 %v235
    %v625 = vunpack.c.l.b16 %v236
    %v626 = vunpack.c.h.b16 %v236
    %v627 = vunpack.c.l.b16 %v237
    %v628 = vunpack.c.h.b16 %v237
    %v629 = vunpack.c.l.b16 %v238
    %v630 = vunpack.c.h.b16 %v238
    %v631 = vunpack.c.l.b16 %v239
    %v632 = vunpack.c.h.b16 %v239
    %v633 = vunpack.c.l.b16 %v240
    %v634 = vunpack.c.h.b16 %v240
    %v635 = vunpack.c.l.b16 %v241
    %v636 = vunpack.c.h.b16 %v241
    %v637 = vunpack.c.l.b16 %v242
    %v638 = vunpack.c.h.b16 %v242
    %v639 = vunpack.c.l.b16 %v243
    %v640 = vunpack.c.h.b16 %v243
    %v641 = vunpack.c.l.b16 %v244
    %v642 = vunpack.c.h.b16 %v244
    %v643 = vunpack.c.l.b16 %v245
    %v644 = vunpack.c.h.b16 %v245
    %v645 = vunpack.c.l.b16 %v246
    %v646 = vunpack.c.h.b16 %v246
    %v647 = vunpack.c.l.b16 %v247
    %v648 = vunpack.c.h.b16 %v247
    %v649 = vunpack.c.l.b16 %v248
    %v650 = vunpack.c.h.b16 %v248
    %v651 = vunpack.c.l.b16 %v249
    %v652 = vunpack.c.h.b16 %v249
    %v653 = vunpack.c.l.b16 %v250
    %v654 = vunpack.c.h.b16 %v250
    %v655 = vunpack.c.l.b16 %v251
    %v656 = vunpack.c.h.b16 %v251
    %v657 = vunpack.c.l.b16 %v252
    %v658 = vunpack.c.h.b16 %v252
    %v659 = vpack.c.b16 %v407, %v403
    %v660 = vpack.c.b16 %v408, %v404
    %v661 = vpack.c.b16 %v409, %v405
    %v662 = vpack.c.b16 %v410, %v406
    %v663 = vpack.c.b16 %v415, %v411
    %v664 = vpack.c.b16 %v416, %v412
    %v665 = vpack.c.b16 %v417, %v413
    %v666 = vpack.c.b16 %v418, %v414
    %v667 = vpack.c.b16 %v423, %v419
    %v668 = vpack.c.b16 %v424, %v420
    %v669 = vpack.c.b16 %v425, %v421
    %v670 = vpack.c.b16 %v426, %v422
    %v671 = vpack.c.b16 %v431, %v427
    %v672 = vpack.c.b16 %v432, %v428
    %v673 = vpack.c.b16 %v433, %v429
    %v674 = vpack.c.b16 %v434, %v430
    %v675 = vpack.c.b16 %v439, %v435
    %v676 = vpack.c.b16 %v440, %v436
    %v677 = vpack.c.b16 %v441, %v437
    %v678 = vpack.c.b16 %v442, %v438
    %v679 = vpack.c.b16 %v447, %v443
    %v680 = vpack.c.b16 %v448, %v444
    %v681 = vpack.c.b16 %v449, %v445
    %v682 = vpack.c.b16 %v450, %v446
    %v683 = vpack.c.b16 %v455, %v451
    %v684 = vpack.c.b16 %v456, %v452
    %v685 = vpack.c.b16 %v457, %v453
    %v686 = vpack.c.b16 %v458, %v454
    %v687 = vpack.c.b16 %v463, %v459
    %v688 = vpack.c.b16 %v464, %v460
    %v689 = vpack.c.b16 %v465, %v461
    %v690 = vpack.c.b16 %v466, %v462
    %v691 = vpack.c.b16 %v471, %v467
    %v692 = vpack.c.b16 %v472, %v468
    %v693 = vpack.c.b16 %v473, %v469
    %v694 = vpack.c.b16 %v474, %v470
    %v695 = vpack.c.b16 %v479, %v475
    %v696 = vpack.c.b16 %v480, %v476
    %v697 = vpack.c.b16 %v481, %v477
    %v698 = vpack.c.b16 %v482, %v478
    %v699 = vpack.c.b16 %v487, %v483
    %v700 = vpack.c.b16 %v488, %v484
    %v701 = vpack.c.b16 %v489, %v485
    %v702 = vpack.c.b16 %v490, %v486
    %v703 = vpack.c.b16 %v495, %v491
    %v704 = vpack.c.b16 %v496, %v492
    %v705 = vpack.c.b16 %v497, %v493
    %v706 = vpack.c.b16 %v498, %v494
    %v707 = vpack.c.b16 %v503, %v499
    %v708 = vpack.c.b16 %v504, %v500
    %v709 = vpack.c.b16 %v505, %v501
    %v710 = vpack.c.b16 %v506, %v502
    %v711 = vpack.c.b16 %v511, %v507
    %v712 = vpack.c.b16 %v512, %v508
    %v713 = vpack.c.b16 %v513, %v509
    %v714 = vpack.c.b16 %v514, %v510
    %v715 = vpack.c.b16 %v519, %v515
    %v716 = vpack.c.b16 %v520, %v516
    %v717 = vpack.c.b16 %v521, %v517
    %v718 = vpack.c.b16 %v522, %v518
    %v719 = vpack.c.b16 %v527, %v523
    %v720 = vpack.c.b16 %v528, %v524
    %v721 = vpack.c.b16 %v529, %v525
    %v722 = vpack.c.b16 %v530, %v526
    %v723 = vpack.c.b16 %v535, %v531
    %v724 = vpack.c.b16 %v536, %v532
    %v725 = vpack.c.b16 %v537, %v533
    %v726 = vpack.c.b16 %v538, %v534
    %v727 = vpack.c.b16 %v543, %v539
    %v728 = vpack.c.b16 %v544, %v540
    %v729 = vpack.c.b16 %v545, %v541
    %v730 = vpack.c.b16 %v546, %v542
    %v731 = vpack.c.b16 %v551, %v547
    %v732 = vpack.c.b16 %v552, %v548
    %v733 = vpack.c.b16 %v553, %v549
    %v734 = vpack.c.b16 %v554, %v550
    %v735 = vpack.c.b16 %v559, %v555
    %v736 = vpack.c.b16 %v560, %v556
    %v737 = vpack.c.b16 %v561, %v557
    %v738 = vpack.c.b16 %v562, %v558
    %v739 = vpack.c.b16 %v567, %v563
    %v740 = vpack.c.b16 %v568, %v564
    %v741 = vpack.c.b16 %v569, %v565
    %v742 = vpack.c.b16 %v570, %v566
    %v743 = vpack.c.b16 %v575, %v571
    %v744 = vpack.c.b16 %v576, %v572
    %v745 = vpack.c.b16 %v577, %v573
    %v746 = vpack.c.b16 %v578, %v574
    %v747 = vpack.c.b16 %v583, %v579
    %v748 = vpack.c.b16 %v584, %v580
    %v749 = vpack.c.b16 %v585, %v581
    %v750 = vpack.c.b16 %v586, %v582
    %v751 = vpack.c.b16 %v591, %v587
    %v752 = vpack.c.b16 %v592, %v588
    %v753 = vpack.c.b16 %v593, %v589
    %v754 = vpack.c.b16 %v594, %v590
    %v755 = vpack.c.b16 %v599, %v595
    %v756 = vpack.c.b16 %v600, %v596
    %v757 = vpack.c.b16 %v601, %v597
    %v758 = vpack.c.b16 %v602, %v598
    %v759 = vpack.c.b16 %v607, %v603
    %v760 = vpack.c.b16 %v608, %v604
    %v761 = vpack.c.b16 %v609, %v605
    %v762 = vpack.c.b16 %v610, %v606
    %v763 = vpack.c.b16 %v615, %v611
    %v764 = vpack.c.b16 %v616, %v612
    %v765 = vpack.c.b16 %v617, %v613
    %v766 = vpack.c.b16 %v618, %v614
    %v767 = vpack.c.b16 %v623, %v619
    %v768 = vpack.c.b16 %v624, %v620
    %v769 = vpack.c.b16 %v625, %v621
    %v770 = vpack.c.b16 %v626, %v622
    %v771 = vpack.c.b16 %v631, %v627
    %v772 = vpack.c.b16 %v632, %v628
    %v773 = vpack.c.b16 %v633, %v629
    %v774 = vpack.c.b16 %v634, %v630
    %v775 = vpack.c.b16 %v639, %v635
    %v776 = vpack.c.b16 %v640, %v636
    %v777 = vpack.c.b16 %v641, %v637
    %v778 = vpack.c.b16 %v642, %v638
    %v779 = vpack.c.b16 %v647, %v643
    %v780 = vpack.c.b16 %v648, %v644
    %v781 = vpack.c.b16 %v649, %v645
    %v782 = vpack.c.b16 %v650, %v646
    %v783 = vpack.c.b16 %v655, %v651
    %v784 = vpack.c.b16 %v656, %v652
    %v785 = vpack.c.b16 %v657, %v653
    %v786 = vpack.c.b16 %v658, %v654
    %915 = vmatprep.subr.bf16.mxu0 %v660
    %916 = vmatpush1.bf16.msra.mxu0 %v659
    %917 = vmatprep.subr.bf16.mxu0 %v664
    %918 = vmatpush1.bf16.msra.mxu0 %v663
    %919 = vmatprep.subr.bf16.mxu0 %v668
    %920 = vmatpush1.bf16.msra.mxu0 %v667
    %921 = vmatprep.subr.bf16.mxu0 %v672
    %922 = vmatpush1.bf16.msra.mxu0 %v671
    %923 = vmatprep.subr.bf16.mxu0 %v676
    %924 = vmatpush1.bf16.msra.mxu0 %v675
    %925 = vmatprep.subr.bf16.mxu0 %v680
    %926 = vmatpush1.bf16.msra.mxu0 %v679
    %927 = vmatprep.subr.bf16.mxu0 %v684
    %928 = vmatpush1.bf16.msra.mxu0 %v683
    %929 = vmatprep.subr.bf16.mxu0 %v688
    %930 = vmatpush1.bf16.msra.mxu0 %v687
    %931 = vmatprep.subr.bf16.mxu0 %v692
    %932 = vmatpush1.bf16.msra.mxu0 %v691
    %933 = vmatprep.subr.bf16.mxu0 %v696
    %934 = vmatpush1.bf16.msra.mxu0 %v695
    %935 = vmatprep.subr.bf16.mxu0 %v700
    %936 = vmatpush1.bf16.msra.mxu0 %v699
    %937 = vmatprep.subr.bf16.mxu0 %v704
    %938 = vmatpush1.bf16.msra.mxu0 %v703
    %939 = vmatprep.subr.bf16.mxu0 %v708
    %940 = vmatpush1.bf16.msra.mxu0 %v707
    %941 = vmatprep.subr.bf16.mxu0 %v712
    %942 = vmatpush1.bf16.msra.mxu0 %v711
    %943 = vmatprep.subr.bf16.mxu0 %v716
    %944 = vmatpush1.bf16.msra.mxu0 %v715
    %945 = vmatprep.subr.bf16.mxu0 %v720
    %946 = vmatpush1.bf16.msra.mxu0 %v719
    %947 = vmatprep.mubr.bf16.mxu0 %v98
    %948 = vmatmul.mubr.bf16.gmra.mrb[0].mxu0 %v97
    %v949 = vpop.f32.mrb[0].mxu0
    %v950 = vadd.f32 %v258, %v949
    %v951 = vpop.f32.mrb[0].mxu0
    %v952 = vadd.f32 %v262, %v951
    %v953 = vpop.f32.mrb[0].mxu0
    %v954 = vadd.f32 %v258, %v953
    %v955 = vpop.f32.mrb[0].mxu0
    %v956 = vadd.f32 %v262, %v955
    %957 = vdwg.mxu0
    %958 = vmatprep.subr.bf16.mxu0 %v724
    %959 = vmatpush1.bf16.msra.mxu0 %v723
    %960 = vmatprep.subr.bf16.mxu0 %v728
    %961 = vmatpush1.bf16.msra.mxu0 %v727
    %962 = vmatprep.subr.bf16.mxu0 %v732
    %963 = vmatpush1.bf16.msra.mxu0 %v731
    %964 = vmatprep.subr.bf16.mxu0 %v736
    %965 = vmatpush1.bf16.msra.mxu0 %v735
    %966 = vmatprep.subr.bf16.mxu0 %v740
    %967 = vmatpush1.bf16.msra.mxu0 %v739
    %968 = vmatprep.subr.bf16.mxu0 %v744
    %969 = vmatpush1.bf16.msra.mxu0 %v743
    %970 = vmatprep.subr.bf16.mxu0 %v748
    %971 = vmatpush1.bf16.msra.mxu0 %v747
    %972 = vmatprep.subr.bf16.mxu0 %v752
    %973 = vmatpush1.bf16.msra.mxu0 %v751
    %974 = vmatprep.subr.bf16.mxu0 %v756
    %975 = vmatpush1.bf16.msra.mxu0 %v755
    %976 = vmatprep.subr.bf16.mxu0 %v760
    %977 = vmatpush1.bf16.msra.mxu0 %v759
    %978 = vmatprep.subr.bf16.mxu0 %v764
    %979 = vmatpush1.bf16.msra.mxu0 %v763
    %980 = vmatprep.subr.bf16.mxu0 %v768
    %981 = vmatpush1.bf16.msra.mxu0 %v767
    %982 = vmatprep.subr.bf16.mxu0 %v772
    %983 = vmatpush1.bf16.msra.mxu0 %v771
    %984 = vmatprep.subr.bf16.mxu0 %v776
    %985 = vmatpush1.bf16.msra.mxu0 %v775
    %986 = vmatprep.subr.bf16.mxu0 %v780
    %987 = vmatpush1.bf16.msra.mxu0 %v779
    %988 = vmatprep.subr.bf16.mxu0 %v784
    %989 = vmatpush1.bf16.msra.mxu0 %v783
    %990 = vmatprep.mubr.bf16.mxu0 %v100
    %991 = vmatmul.mubr.bf16.gmra.mrb[0].mxu0 %v99
    %v992 = vpop.f32.mrb[0].mxu0
    %v993 = vadd.f32 %v950, %v992
    %v994 = vpop.f32.mrb[0].mxu0
    %v995 = vadd.f32 %v952, %v994
    %v996 = vpop.f32.mrb[0].mxu0
    %v997 = vadd.f32 %v954, %v996
    %v998 = vpop.f32.mrb[0].mxu0
    %v999 = vadd.f32 %v956, %v998
    %1000 = vdwg.mxu0
    %1001 = vmatprep.subr.bf16.mxu0 %v662
    %1002 = vmatpush1.bf16.msra.mxu0 %v661
    %1003 = vmatprep.subr.bf16.mxu0 %v666
    %1004 = vmatpush1.bf16.msra.mxu0 %v665
    %1005 = vmatprep.subr.bf16.mxu0 %v670
    %1006 = vmatpush1.bf16.msra.mxu0 %v669
    %1007 = vmatprep.subr.bf16.mxu0 %v674
    %1008 = vmatpush1.bf16.msra.mxu0 %v673
    %1009 = vmatprep.subr.bf16.mxu0 %v678
    %1010 = vmatpush1.bf16.msra.mxu0 %v677
    %1011 = vmatprep.subr.bf16.mxu0 %v682
    %1012 = vmatpush1.bf16.msra.mxu0 %v681
    %1013 = vmatprep.subr.bf16.mxu0 %v686
    %1014 = vmatpush1.bf16.msra.mxu0 %v685
    %1015 = vmatprep.subr.bf16.mxu0 %v690
    %1016 = vmatpush1.bf16.msra.mxu0 %v689
    %1017 = vmatprep.subr.bf16.mxu0 %v694
    %1018 = vmatpush1.bf16.msra.mxu0 %v693
    %1019 = vmatprep.subr.bf16.mxu0 %v698
    %1020 = vmatpush1.bf16.msra.mxu0 %v697
    %1021 = vmatprep.subr.bf16.mxu0 %v702
    %1022 = vmatpush1.bf16.msra.mxu0 %v701
    %1023 = vmatprep.subr.bf16.mxu0 %v706
    %1024 = vmatpush1.bf16.msra.mxu0 %v705
    %1025 = vmatprep.subr.bf16.mxu0 %v710
    %1026 = vmatpush1.bf16.msra.mxu0 %v709
    %1027 = vmatprep.subr.bf16.mxu0 %v714
    %1028 = vmatpush1.bf16.msra.mxu0 %v713
    %1029 = vmatprep.subr.bf16.mxu0 %v718
    %1030 = vmatpush1.bf16.msra.mxu0 %v717
    %1031 = vmatprep.subr.bf16.mxu0 %v722
    %1032 = vmatpush1.bf16.msra.mxu0 %v721
    %1033 = vmatprep.mubr.bf16.mxu0 %v98
    %1034 = vmatmul.mubr.bf16.gmra.mrb[0].mxu0 %v97
    %v1035 = vpop.f32.mrb[0].mxu0
    %v1036 = vadd.f32 %v266, %v1035
    %v1037 = vpop.f32.mrb[0].mxu0
    %v1038 = vadd.f32 %v270, %v1037
    %v1039 = vpop.f32.mrb[0].mxu0
    %v1040 = vadd.f32 %v266, %v1039
    %v1041 = vpop.f32.mrb[0].mxu0
    %v1042 = vadd.f32 %v270, %v1041
    %1043 = vdwg.mxu0
    %1044 = vmatprep.subr.bf16.mxu0 %v726
    %1045 = vmatpush1.bf16.msra.mxu0 %v725
    %1046 = vmatprep.subr.bf16.mxu0 %v730
    %1047 = vmatpush1.bf16.msra.mxu0 %v729
    %1048 = vmatprep.subr.bf16.mxu0 %v734
    %1049 = vmatpush1.bf16.msra.mxu0 %v733
    %1050 = vmatprep.subr.bf16.mxu0 %v738
    %1051 = vmatpush1.bf16.msra.mxu0 %v737
    %1052 = vmatprep.subr.bf16.mxu0 %v742
    %1053 = vmatpush1.bf16.msra.mxu0 %v741
    %1054 = vmatprep.subr.bf16.mxu0 %v746
    %1055 = vmatpush1.bf16.msra.mxu0 %v745
    %1056 = vmatprep.subr.bf16.mxu0 %v750
    %1057 = vmatpush1.bf16.msra.mxu0 %v749
    %1058 = vmatprep.subr.bf16.mxu0 %v754
    %1059 = vmatpush1.bf16.msra.mxu0 %v753
    %1060 = vmatprep.subr.bf16.mxu0 %v758
    %1061 = vmatpush1.bf16.msra.mxu0 %v757
    %1062 = vmatprep.subr.bf16.mxu0 %v762
    %1063 = vmatpush1.bf16.msra.mxu0 %v761
    %1064 = vmatprep.subr.bf16.mxu0 %v766
    %1065 = vmatpush1.bf16.msra.mxu0 %v765
    %1066 = vmatprep.subr.bf16.mxu0 %v770
    %1067 = vmatpush1.bf16.msra.mxu0 %v769
    %1068 = vmatprep.subr.bf16.mxu0 %v774
    %1069 = vmatpush1.bf16.msra.mxu0 %v773
    %1070 = vmatprep.subr.bf16.mxu0 %v778
    %1071 = vmatpush1.bf16.msra.mxu0 %v777
    %1072 = vmatprep.subr.bf16.mxu0 %v782
    %1073 = vmatpush1.bf16.msra.mxu0 %v781
    %1074 = vmatprep.subr.bf16.mxu0 %v786
    %1075 = vmatpush1.bf16.msra.mxu0 %v785
    %1076 = vmatprep.mubr.bf16.mxu0 %v100
    %1077 = vmatmul.mubr.bf16.gmra.mrb[0].mxu0 %v99
    %v1078 = vpop.f32.mrb[0].mxu0
    %v1079 = vadd.f32 %v1036, %v1078
    %v1080 = vpop.f32.mrb[0].mxu0
    %v1081 = vadd.f32 %v1038, %v1080
    %v1082 = vpop.f32.mrb[0].mxu0
    %v1083 = vadd.f32 %v1040, %v1082
    %v1084 = vpop.f32.mrb[0].mxu0
    %v1085 = vadd.f32 %v1042, %v1084
    %1086 = vdwg.mxu0
    %v1087 = vpack.c.bf16 %v997, %v993
    %v1088 = vpack.c.bf16 %v999, %v995
    %v1089 = vpack.c.bf16 %v1083, %v1079
    %v1090 = vpack.c.bf16 %v1085, %v1081
    %v1095 = vunpack.c.l.b16 %v1087
    %v1096 = vunpack.c.l.b16 %v1088
    %v1097 = vunpack.c.l.b16 %v1089
    %v1098 = vunpack.c.l.b16 %v1090
    %v1099 = vunpack.c.h.b16 %v1087
    %v1100 = vunpack.c.h.b16 %v1088
    %v1101 = vunpack.c.h.b16 %v1089
    %v1102 = vunpack.c.h.b16 %v1090
    %v1103 = vpack.c.b16 %v1096, %v1095
    %v1104 = vpack.c.b16 %v1098, %v1097
    %v1105 = vpack.c.b16 %v1100, %v1099
    %v1106 = vpack.c.b16 %v1102, %v1101
    %1111 = vst [vmem:[#allocation11] sm:$0xff] %v1103
    %1112 = vst [vmem:[#allocation11 + $0x8] sm:$0xff] %v1104
    %1113 = vst [vmem:[#allocation11 + $0x10] sm:$0xff] %v1105
    %1114 = vst [vmem:[#allocation11 + $0x18] sm:$0xff] %v1106
    %s1115 = scalar_lea.vmem [#allocation8], 1024
    %v1116 = vld [vmem:[%s1115] sm:$0xff]
    %v1117 = vld [vmem:[%s1115 + $0x8] sm:$0xff]
    %v1118 = vld [vmem:[%s1115 + $0x10] sm:$0xff]
    %v1119 = vld [vmem:[%s1115 + $0x18] sm:$0xff]
    %v1120 = vld [vmem:[%s1115 + $0x20] sm:$0xff]
    %v1121 = vld [vmem:[%s1115 + $0x28] sm:$0xff]
    %v1122 = vld [vmem:[%s1115 + $0x30] sm:$0xff]
    %v1123 = vld [vmem:[%s1115 + $0x38] sm:$0xff]
    %v1124 = vld [vmem:[%s1115 + $0x40] sm:$0xff]
    %v1125 = vld [vmem:[%s1115 + $0x48] sm:$0xff]
    %v1126 = vld [vmem:[%s1115 + $0x50] sm:$0xff]
    %v1127 = vld [vmem:[%s1115 + $0x58] sm:$0xff]
    %v1128 = vld [vmem:[%s1115 + $0x60] sm:$0xff]
    %v1129 = vld [vmem:[%s1115 + $0x68] sm:$0xff]
    %v1130 = vld [vmem:[%s1115 + $0x70] sm:$0xff]
    %v1131 = vld [vmem:[%s1115 + $0x78] sm:$0xff]
    %v1132 = vld [vmem:[%s1115 + $0x80] sm:$0xff]
    %v1133 = vld [vmem:[%s1115 + $0x88] sm:$0xff]
    %v1134 = vld [vmem:[%s1115 + $0x90] sm:$0xff]
    %v1135 = vld [vmem:[%s1115 + $0x98] sm:$0xff]
    %v1136 = vld [vmem:[%s1115 + $0xa0] sm:$0xff]
    %v1137 = vld [vmem:[%s1115 + $0xa8] sm:$0xff]
    %v1138 = vld [vmem:[%s1115 + $0xb0] sm:$0xff]
    %v1139 = vld [vmem:[%s1115 + $0xb8] sm:$0xff]
    %v1140 = vld [vmem:[%s1115 + $0xc0] sm:$0xff]
    %v1141 = vld [vmem:[%s1115 + $0xc8] sm:$0xff]
    %v1142 = vld [vmem:[%s1115 + $0xd0] sm:$0xff]
    %v1143 = vld [vmem:[%s1115 + $0xd8] sm:$0xff]
    %v1144 = vld [vmem:[%s1115 + $0xe0] sm:$0xff]
    %v1145 = vld [vmem:[%s1115 + $0xe8] sm:$0xff]
    %v1146 = vld [vmem:[%s1115 + $0xf0] sm:$0xff]
    %v1147 = vld [vmem:[%s1115 + $0xf8] sm:$0xff]
    %v1148 = vld [vmem:[%s1115 + $0x100] sm:$0xff]
    %v1149 = vld [vmem:[%s1115 + $0x108] sm:$0xff]
    %v1150 = vld [vmem:[%s1115 + $0x110] sm:$0xff]
    %v1151 = vld [vmem:[%s1115 + $0x118] sm:$0xff]
    %v1152 = vld [vmem:[%s1115 + $0x120] sm:$0xff]
    %v1153 = vld [vmem:[%s1115 + $0x128] sm:$0xff]
    %v1154 = vld [vmem:[%s1115 + $0x130] sm:$0xff]
    %v1155 = vld [vmem:[%s1115 + $0x138] sm:$0xff]
    %v1156 = vld [vmem:[%s1115 + $0x140] sm:$0xff]
    %v1157 = vld [vmem:[%s1115 + $0x148] sm:$0xff]
    %v1158 = vld [vmem:[%s1115 + $0x150] sm:$0xff]
    %v1159 = vld [vmem:[%s1115 + $0x158] sm:$0xff]
    %v1160 = vld [vmem:[%s1115 + $0x160] sm:$0xff]
    %v1161 = vld [vmem:[%s1115 + $0x168] sm:$0xff]
    %v1162 = vld [vmem:[%s1115 + $0x170] sm:$0xff]
    %v1163 = vld [vmem:[%s1115 + $0x178] sm:$0xff]
    %v1164 = vld [vmem:[%s1115 + $0x180] sm:$0xff]
    %v1165 = vld [vmem:[%s1115 + $0x188] sm:$0xff]
    %v1166 = vld [vmem:[%s1115 + $0x190] sm:$0xff]
    %v1167 = vld [vmem:[%s1115 + $0x198] sm:$0xff]
    %v1168 = vld [vmem:[%s1115 + $0x1a0] sm:$0xff]
    %v1169 = vld [vmem:[%s1115 + $0x1a8] sm:$0xff]
    %v1170 = vld [vmem:[%s1115 + $0x1b0] sm:$0xff]
    %v1171 = vld [vmem:[%s1115 + $0x1b8] sm:$0xff]
    %v1172 = vld [vmem:[%s1115 + $0x1c0] sm:$0xff]
    %v1173 = vld [vmem:[%s1115 + $0x1c8] sm:$0xff]
    %v1174 = vld [vmem:[%s1115 + $0x1d0] sm:$0xff]
    %v1175 = vld [vmem:[%s1115 + $0x1d8] sm:$0xff]
    %v1176 = vld [vmem:[%s1115 + $0x1e0] sm:$0xff]
    %v1177 = vld [vmem:[%s1115 + $0x1e8] sm:$0xff]
    %v1178 = vld [vmem:[%s1115 + $0x1f0] sm:$0xff]
    %v1179 = vld [vmem:[%s1115 + $0x1f8] sm:$0xff]
    %v1180 = vld [vmem:[%s1115 + $0x200] sm:$0xff]
    %v1181 = vld [vmem:[%s1115 + $0x208] sm:$0xff]
    %v1182 = vld [vmem:[%s1115 + $0x210] sm:$0xff]
    %v1183 = vld [vmem:[%s1115 + $0x218] sm:$0xff]
    %v1184 = vld [vmem:[%s1115 + $0x220] sm:$0xff]
    %v1185 = vld [vmem:[%s1115 + $0x228] sm:$0xff]
    %v1186 = vld [vmem:[%s1115 + $0x230] sm:$0xff]
    %v1187 = vld [vmem:[%s1115 + $0x238] sm:$0xff]
    %v1188 = vld [vmem:[%s1115 + $0x240] sm:$0xff]
    %v1189 = vld [vmem:[%s1115 + $0x248] sm:$0xff]
    %v1190 = vld [vmem:[%s1115 + $0x250] sm:$0xff]
    %v1191 = vld [vmem:[%s1115 + $0x258] sm:$0xff]
    %v1192 = vld [vmem:[%s1115 + $0x260] sm:$0xff]
    %v1193 = vld [vmem:[%s1115 + $0x268] sm:$0xff]
    %v1194 = vld [vmem:[%s1115 + $0x270] sm:$0xff]
    %v1195 = vld [vmem:[%s1115 + $0x278] sm:$0xff]
    %v1196 = vld [vmem:[%s1115 + $0x280] sm:$0xff]
    %v1197 = vld [vmem:[%s1115 + $0x288] sm:$0xff]
    %v1198 = vld [vmem:[%s1115 + $0x290] sm:$0xff]
    %v1199 = vld [vmem:[%s1115 + $0x298] sm:$0xff]
    %v1200 = vld [vmem:[%s1115 + $0x2a0] sm:$0xff]
    %v1201 = vld [vmem:[%s1115 + $0x2a8] sm:$0xff]
    %v1202 = vld [vmem:[%s1115 + $0x2b0] sm:$0xff]
    %v1203 = vld [vmem:[%s1115 + $0x2b8] sm:$0xff]
    %v1204 = vld [vmem:[%s1115 + $0x2c0] sm:$0xff]
    %v1205 = vld [vmem:[%s1115 + $0x2c8] sm:$0xff]
    %v1206 = vld [vmem:[%s1115 + $0x2d0] sm:$0xff]
    %v1207 = vld [vmem:[%s1115 + $0x2d8] sm:$0xff]
    %v1208 = vld [vmem:[%s1115 + $0x2e0] sm:$0xff]
    %v1209 = vld [vmem:[%s1115 + $0x2e8] sm:$0xff]
    %v1210 = vld [vmem:[%s1115 + $0x2f0] sm:$0xff]
    %v1211 = vld [vmem:[%s1115 + $0x2f8] sm:$0xff]
    %v1212 = vld [vmem:[%s1115 + $0x300] sm:$0xff]
    %v1213 = vld [vmem:[%s1115 + $0x308] sm:$0xff]
    %v1214 = vld [vmem:[%s1115 + $0x310] sm:$0xff]
    %v1215 = vld [vmem:[%s1115 + $0x318] sm:$0xff]
    %v1216 = vld [vmem:[%s1115 + $0x320] sm:$0xff]
    %v1217 = vld [vmem:[%s1115 + $0x328] sm:$0xff]
    %v1218 = vld [vmem:[%s1115 + $0x330] sm:$0xff]
    %v1219 = vld [vmem:[%s1115 + $0x338] sm:$0xff]
    %v1220 = vld [vmem:[%s1115 + $0x340] sm:$0xff]
    %v1221 = vld [vmem:[%s1115 + $0x348] sm:$0xff]
    %v1222 = vld [vmem:[%s1115 + $0x350] sm:$0xff]
    %v1223 = vld [vmem:[%s1115 + $0x358] sm:$0xff]
    %v1224 = vld [vmem:[%s1115 + $0x360] sm:$0xff]
    %v1225 = vld [vmem:[%s1115 + $0x368] sm:$0xff]
    %v1226 = vld [vmem:[%s1115 + $0x370] sm:$0xff]
    %v1227 = vld [vmem:[%s1115 + $0x378] sm:$0xff]
    %v1228 = vld [vmem:[%s1115 + $0x380] sm:$0xff]
    %v1229 = vld [vmem:[%s1115 + $0x388] sm:$0xff]
    %v1230 = vld [vmem:[%s1115 + $0x390] sm:$0xff]
    %v1231 = vld [vmem:[%s1115 + $0x398] sm:$0xff]
    %v1232 = vld [vmem:[%s1115 + $0x3a0] sm:$0xff]
    %v1233 = vld [vmem:[%s1115 + $0x3a8] sm:$0xff]
    %v1234 = vld [vmem:[%s1115 + $0x3b0] sm:$0xff]
    %v1235 = vld [vmem:[%s1115 + $0x3b8] sm:$0xff]
    %v1236 = vld [vmem:[%s1115 + $0x3c0] sm:$0xff]
    %v1237 = vld [vmem:[%s1115 + $0x3c8] sm:$0xff]
    %v1238 = vld [vmem:[%s1115 + $0x3d0] sm:$0xff]
    %v1239 = vld [vmem:[%s1115 + $0x3d8] sm:$0xff]
    %v1240 = vld [vmem:[%s1115 + $0x3e0] sm:$0xff]
    %v1241 = vld [vmem:[%s1115 + $0x3e8] sm:$0xff]
    %v1242 = vld [vmem:[%s1115 + $0x3f0] sm:$0xff]
    %v1243 = vld [vmem:[%s1115 + $0x3f8] sm:$0xff]
    %s1244 = scalar_lea.vmem [#allocation10], 4
    %v1245 = vld [vmem:[%s1244] sm:$0xf]
    %v1247 = vlaneseq
    %v1248 = vshrl.u32 %v1247, 7
    %v1249 = vsub.s32 0, %v1248
    %v1250 = vrot.slane %v1245, %v1249
    %v1251 = vlaneseq
    %v1252 = vshrl.u32 %v1251, 7
    %v1253 = vsub.s32 1, %v1252
    %v1254 = vrot.slane %v1245, %v1253
    %v1255 = vlaneseq
    %v1256 = vshrl.u32 %v1255, 7
    %v1257 = vsub.s32 2, %v1256
    %v1258 = vrot.slane %v1245, %v1257
    %v1259 = vlaneseq
    %v1260 = vshrl.u32 %v1259, 7
    %v1261 = vsub.s32 3, %v1260
    %v1262 = vrot.slane %v1245, %v1261
    %v1395 = vunpack.c.l.b16 %v1116
    %v1396 = vunpack.c.h.b16 %v1116
    %v1397 = vunpack.c.l.b16 %v1117
    %v1398 = vunpack.c.h.b16 %v1117
    %v1399 = vunpack.c.l.b16 %v1118
    %v1400 = vunpack.c.h.b16 %v1118
    %v1401 = vunpack.c.l.b16 %v1119
    %v1402 = vunpack.c.h.b16 %v1119
    %v1403 = vunpack.c.l.b16 %v1120
    %v1404 = vunpack.c.h.b16 %v1120
    %v1405 = vunpack.c.l.b16 %v1121
    %v1406 = vunpack.c.h.b16 %v1121
    %v1407 = vunpack.c.l.b16 %v1122
    %v1408 = vunpack.c.h.b16 %v1122
    %v1409 = vunpack.c.l.b16 %v1123
    %v1410 = vunpack.c.h.b16 %v1123
    %v1411 = vunpack.c.l.b16 %v1124
    %v1412 = vunpack.c.h.b16 %v1124
    %v1413 = vunpack.c.l.b16 %v1125
    %v1414 = vunpack.c.h.b16 %v1125
    %v1415 = vunpack.c.l.b16 %v1126
    %v1416 = vunpack.c.h.b16 %v1126
    %v1417 = vunpack.c.l.b16 %v1127
    %v1418 = vunpack.c.h.b16 %v1127
    %v1419 = vunpack.c.l.b16 %v1128
    %v1420 = vunpack.c.h.b16 %v1128
    %v1421 = vunpack.c.l.b16 %v1129
    %v1422 = vunpack.c.h.b16 %v1129
    %v1423 = vunpack.c.l.b16 %v1130
    %v1424 = vunpack.c.h.b16 %v1130
    %v1425 = vunpack.c.l.b16 %v1131
    %v1426 = vunpack.c.h.b16 %v1131
    %v1427 = vunpack.c.l.b16 %v1132
    %v1428 = vunpack.c.h.b16 %v1132
    %v1429 = vunpack.c.l.b16 %v1133
    %v1430 = vunpack.c.h.b16 %v1133
    %v1431 = vunpack.c.l.b16 %v1134
    %v1432 = vunpack.c.h.b16 %v1134
    %v1433 = vunpack.c.l.b16 %v1135
    %v1434 = vunpack.c.h.b16 %v1135
    %v1435 = vunpack.c.l.b16 %v1136
    %v1436 = vunpack.c.h.b16 %v1136
    %v1437 = vunpack.c.l.b16 %v1137
    %v1438 = vunpack.c.h.b16 %v1137
    %v1439 = vunpack.c.l.b16 %v1138
    %v1440 = vunpack.c.h.b16 %v1138
    %v1441 = vunpack.c.l.b16 %v1139
    %v1442 = vunpack.c.h.b16 %v1139
    %v1443 = vunpack.c.l.b16 %v1140
    %v1444 = vunpack.c.h.b16 %v1140
    %v1445 = vunpack.c.l.b16 %v1141
    %v1446 = vunpack.c.h.b16 %v1141
    %v1447 = vunpack.c.l.b16 %v1142
    %v1448 = vunpack.c.h.b16 %v1142
    %v1449 = vunpack.c.l.b16 %v1143
    %v1450 = vunpack.c.h.b16 %v1143
    %v1451 = vunpack.c.l.b16 %v1144
    %v1452 = vunpack.c.h.b16 %v1144
    %v1453 = vunpack.c.l.b16 %v1145
    %v1454 = vunpack.c.h.b16 %v1145
    %v1455 = vunpack.c.l.b16 %v1146
    %v1456 = vunpack.c.h.b16 %v1146
    %v1457 = vunpack.c.l.b16 %v1147
    %v1458 = vunpack.c.h.b16 %v1147
    %v1459 = vunpack.c.l.b16 %v1148
    %v1460 = vunpack.c.h.b16 %v1148
    %v1461 = vunpack.c.l.b16 %v1149
    %v1462 = vunpack.c.h.b16 %v1149
    %v1463 = vunpack.c.l.b16 %v1150
    %v1464 = vunpack.c.h.b16 %v1150
    %v1465 = vunpack.c.l.b16 %v1151
    %v1466 = vunpack.c.h.b16 %v1151
    %v1467 = vunpack.c.l.b16 %v1152
    %v1468 = vunpack.c.h.b16 %v1152
    %v1469 = vunpack.c.l.b16 %v1153
    %v1470 = vunpack.c.h.b16 %v1153
    %v1471 = vunpack.c.l.b16 %v1154
    %v1472 = vunpack.c.h.b16 %v1154
    %v1473 = vunpack.c.l.b16 %v1155
    %v1474 = vunpack.c.h.b16 %v1155
    %v1475 = vunpack.c.l.b16 %v1156
    %v1476 = vunpack.c.h.b16 %v1156
    %v1477 = vunpack.c.l.b16 %v1157
    %v1478 = vunpack.c.h.b16 %v1157
    %v1479 = vunpack.c.l.b16 %v1158
    %v1480 = vunpack.c.h.b16 %v1158
    %v1481 = vunpack.c.l.b16 %v1159
    %v1482 = vunpack.c.h.b16 %v1159
    %v1483 = vunpack.c.l.b16 %v1160
    %v1484 = vunpack.c.h.b16 %v1160
    %v1485 = vunpack.c.l.b16 %v1161
    %v1486 = vunpack.c.h.b16 %v1161
    %v1487 = vunpack.c.l.b16 %v1162
    %v1488 = vunpack.c.h.b16 %v1162
    %v1489 = vunpack.c.l.b16 %v1163
    %v1490 = vunpack.c.h.b16 %v1163
    %v1491 = vunpack.c.l.b16 %v1164
    %v1492 = vunpack.c.h.b16 %v1164
    %v1493 = vunpack.c.l.b16 %v1165
    %v1494 = vunpack.c.h.b16 %v1165
    %v1495 = vunpack.c.l.b16 %v1166
    %v1496 = vunpack.c.h.b16 %v1166
    %v1497 = vunpack.c.l.b16 %v1167
    %v1498 = vunpack.c.h.b16 %v1167
    %v1499 = vunpack.c.l.b16 %v1168
    %v1500 = vunpack.c.h.b16 %v1168
    %v1501 = vunpack.c.l.b16 %v1169
    %v1502 = vunpack.c.h.b16 %v1169
    %v1503 = vunpack.c.l.b16 %v1170
    %v1504 = vunpack.c.h.b16 %v1170
    %v1505 = vunpack.c.l.b16 %v1171
    %v1506 = vunpack.c.h.b16 %v1171
    %v1507 = vunpack.c.l.b16 %v1172
    %v1508 = vunpack.c.h.b16 %v1172
    %v1509 = vunpack.c.l.b16 %v1173
    %v1510 = vunpack.c.h.b16 %v1173
    %v1511 = vunpack.c.l.b16 %v1174
    %v1512 = vunpack.c.h.b16 %v1174
    %v1513 = vunpack.c.l.b16 %v1175
    %v1514 = vunpack.c.h.b16 %v1175
    %v1515 = vunpack.c.l.b16 %v1176
    %v1516 = vunpack.c.h.b16 %v1176
    %v1517 = vunpack.c.l.b16 %v1177
    %v1518 = vunpack.c.h.b16 %v1177
    %v1519 = vunpack.c.l.b16 %v1178
    %v1520 = vunpack.c.h.b16 %v1178
    %v1521 = vunpack.c.l.b16 %v1179
    %v1522 = vunpack.c.h.b16 %v1179
    %v1523 = vunpack.c.l.b16 %v1180
    %v1524 = vunpack.c.h.b16 %v1180
    %v1525 = vunpack.c.l.b16 %v1181
    %v1526 = vunpack.c.h.b16 %v1181
    %v1527 = vunpack.c.l.b16 %v1182
    %v1528 = vunpack.c.h.b16 %v1182
    %v1529 = vunpack.c.l.b16 %v1183
    %v1530 = vunpack.c.h.b16 %v1183
    %v1531 = vunpack.c.l.b16 %v1184
    %v1532 = vunpack.c.h.b16 %v1184
    %v1533 = vunpack.c.l.b16 %v1185
    %v1534 = vunpack.c.h.b16 %v1185
    %v1535 = vunpack.c.l.b16 %v1186
    %v1536 = vunpack.c.h.b16 %v1186
    %v1537 = vunpack.c.l.b16 %v1187
    %v1538 = vunpack.c.h.b16 %v1187
    %v1539 = vunpack.c.l.b16 %v1188
    %v1540 = vunpack.c.h.b16 %v1188
    %v1541 = vunpack.c.l.b16 %v1189
    %v1542 = vunpack.c.h.b16 %v1189
    %v1543 = vunpack.c.l.b16 %v1190
    %v1544 = vunpack.c.h.b16 %v1190
    %v1545 = vunpack.c.l.b16 %v1191
    %v1546 = vunpack.c.h.b16 %v1191
    %v1547 = vunpack.c.l.b16 %v1192
    %v1548 = vunpack.c.h.b16 %v1192
    %v1549 = vunpack.c.l.b16 %v1193
    %v1550 = vunpack.c.h.b16 %v1193
    %v1551 = vunpack.c.l.b16 %v1194
    %v1552 = vunpack.c.h.b16 %v1194
    %v1553 = vunpack.c.l.b16 %v1195
    %v1554 = vunpack.c.h.b16 %v1195
    %v1555 = vunpack.c.l.b16 %v1196
    %v1556 = vunpack.c.h.b16 %v1196
    %v1557 = vunpack.c.l.b16 %v1197
    %v1558 = vunpack.c.h.b16 %v1197
    %v1559 = vunpack.c.l.b16 %v1198
    %v1560 = vunpack.c.h.b16 %v1198
    %v1561 = vunpack.c.l.b16 %v1199
    %v1562 = vunpack.c.h.b16 %v1199
    %v1563 = vunpack.c.l.b16 %v1200
    %v1564 = vunpack.c.h.b16 %v1200
    %v1565 = vunpack.c.l.b16 %v1201
    %v1566 = vunpack.c.h.b16 %v1201
    %v1567 = vunpack.c.l.b16 %v1202
    %v1568 = vunpack.c.h.b16 %v1202
    %v1569 = vunpack.c.l.b16 %v1203
    %v1570 = vunpack.c.h.b16 %v1203
    %v1571 = vunpack.c.l.b16 %v1204
    %v1572 = vunpack.c.h.b16 %v1204
    %v1573 = vunpack.c.l.b16 %v1205
    %v1574 = vunpack.c.h.b16 %v1205
    %v1575 = vunpack.c.l.b16 %v1206
    %v1576 = vunpack.c.h.b16 %v1206
    %v1577 = vunpack.c.l.b16 %v1207
    %v1578 = vunpack.c.h.b16 %v1207
    %v1579 = vunpack.c.l.b16 %v1208
    %v1580 = vunpack.c.h.b16 %v1208
    %v1581 = vunpack.c.l.b16 %v1209
    %v1582 = vunpack.c.h.b16 %v1209
    %v1583 = vunpack.c.l.b16 %v1210
    %v1584 = vunpack.c.h.b16 %v1210
    %v1585 = vunpack.c.l.b16 %v1211
    %v1586 = vunpack.c.h.b16 %v1211
    %v1587 = vunpack.c.l.b16 %v1212
    %v1588 = vunpack.c.h.b16 %v1212
    %v1589 = vunpack.c.l.b16 %v1213
    %v1590 = vunpack.c.h.b16 %v1213
    %v1591 = vunpack.c.l.b16 %v1214
    %v1592 = vunpack.c.h.b16 %v1214
    %v1593 = vunpack.c.l.b16 %v1215
    %v1594 = vunpack.c.h.b16 %v1215
    %v1595 = vunpack.c.l.b16 %v1216
    %v1596 = vunpack.c.h.b16 %v1216
    %v1597 = vunpack.c.l.b16 %v1217
    %v1598 = vunpack.c.h.b16 %v1217
    %v1599 = vunpack.c.l.b16 %v1218
    %v1600 = vunpack.c.h.b16 %v1218
    %v1601 = vunpack.c.l.b16 %v1219
    %v1602 = vunpack.c.h.b16 %v1219
    %v1603 = vunpack.c.l.b16 %v1220
    %v1604 = vunpack.c.h.b16 %v1220
    %v1605 = vunpack.c.l.b16 %v1221
    %v1606 = vunpack.c.h.b16 %v1221
    %v1607 = vunpack.c.l.b16 %v1222
    %v1608 = vunpack.c.h.b16 %v1222
    %v1609 = vunpack.c.l.b16 %v1223
    %v1610 = vunpack.c.h.b16 %v1223
    %v1611 = vunpack.c.l.b16 %v1224
    %v1612 = vunpack.c.h.b16 %v1224
    %v1613 = vunpack.c.l.b16 %v1225
    %v1614 = vunpack.c.h.b16 %v1225
    %v1615 = vunpack.c.l.b16 %v1226
    %v1616 = vunpack.c.h.b16 %v1226
    %v1617 = vunpack.c.l.b16 %v1227
    %v1618 = vunpack.c.h.b16 %v1227
    %v1619 = vunpack.c.l.b16 %v1228
    %v1620 = vunpack.c.h.b16 %v1228
    %v1621 = vunpack.c.l.b16 %v1229
    %v1622 = vunpack.c.h.b16 %v1229
    %v1623 = vunpack.c.l.b16 %v1230
    %v1624 = vunpack.c.h.b16 %v1230
    %v1625 = vunpack.c.l.b16 %v1231
    %v1626 = vunpack.c.h.b16 %v1231
    %v1627 = vunpack.c.l.b16 %v1232
    %v1628 = vunpack.c.h.b16 %v1232
    %v1629 = vunpack.c.l.b16 %v1233
    %v1630 = vunpack.c.h.b16 %v1233
    %v1631 = vunpack.c.l.b16 %v1234
    %v1632 = vunpack.c.h.b16 %v1234
    %v1633 = vunpack.c.l.b16 %v1235
    %v1634 = vunpack.c.h.b16 %v1235
    %v1635 = vunpack.c.l.b16 %v1236
    %v1636 = vunpack.c.h.b16 %v1236
    %v1637 = vunpack.c.l.b16 %v1237
    %v1638 = vunpack.c.h.b16 %v1237
    %v1639 = vunpack.c.l.b16 %v1238
    %v1640 = vunpack.c.h.b16 %v1238
    %v1641 = vunpack.c.l.b16 %v1239
    %v1642 = vunpack.c.h.b16 %v1239
    %v1643 = vunpack.c.l.b16 %v1240
    %v1644 = vunpack.c.h.b16 %v1240
    %v1645 = vunpack.c.l.b16 %v1241
    %v1646 = vunpack.c.h.b16 %v1241
    %v1647 = vunpack.c.l.b16 %v1242
    %v1648 = vunpack.c.h.b16 %v1242
    %v1649 = vunpack.c.l.b16 %v1243
    %v1650 = vunpack.c.h.b16 %v1243
    %v1651 = vpack.c.b16 %v1399, %v1395
    %v1652 = vpack.c.b16 %v1400, %v1396
    %v1653 = vpack.c.b16 %v1401, %v1397
    %v1654 = vpack.c.b16 %v1402, %v1398
    %v1655 = vpack.c.b16 %v1407, %v1403
    %v1656 = vpack.c.b16 %v1408, %v1404
    %v1657 = vpack.c.b16 %v1409, %v1405
    %v1658 = vpack.c.b16 %v1410, %v1406
    %v1659 = vpack.c.b16 %v1415, %v1411
    %v1660 = vpack.c.b16 %v1416, %v1412
    %v1661 = vpack.c.b16 %v1417, %v1413
    %v1662 = vpack.c.b16 %v1418, %v1414
    %v1663 = vpack.c.b16 %v1423, %v1419
    %v1664 = vpack.c.b16 %v1424, %v1420
    %v1665 = vpack.c.b16 %v1425, %v1421
    %v1666 = vpack.c.b16 %v1426, %v1422
    %v1667 = vpack.c.b16 %v1431, %v1427
    %v1668 = vpack.c.b16 %v1432, %v1428
    %v1669 = vpack.c.b16 %v1433, %v1429
    %v1670 = vpack.c.b16 %v1434, %v1430
    %v1671 = vpack.c.b16 %v1439, %v1435
    %v1672 = vpack.c.b16 %v1440, %v1436
    %v1673 = vpack.c.b16 %v1441, %v1437
    %v1674 = vpack.c.b16 %v1442, %v1438
    %v1675 = vpack.c.b16 %v1447, %v1443
    %v1676 = vpack.c.b16 %v1448, %v1444
    %v1677 = vpack.c.b16 %v1449, %v1445
    %v1678 = vpack.c.b16 %v1450, %v1446
    %v1679 = vpack.c.b16 %v1455, %v1451
    %v1680 = vpack.c.b16 %v1456, %v1452
    %v1681 = vpack.c.b16 %v1457, %v1453
    %v1682 = vpack.c.b16 %v1458, %v1454
    %v1683 = vpack.c.b16 %v1463, %v1459
    %v1684 = vpack.c.b16 %v1464, %v1460
    %v1685 = vpack.c.b16 %v1465, %v1461
    %v1686 = vpack.c.b16 %v1466, %v1462
    %v1687 = vpack.c.b16 %v1471, %v1467
    %v1688 = vpack.c.b16 %v1472, %v1468
    %v1689 = vpack.c.b16 %v1473, %v1469
    %v1690 = vpack.c.b16 %v1474, %v1470
    %v1691 = vpack.c.b16 %v1479, %v1475
    %v1692 = vpack.c.b16 %v1480, %v1476
    %v1693 = vpack.c.b16 %v1481, %v1477
    %v1694 = vpack.c.b16 %v1482, %v1478
    %v1695 = vpack.c.b16 %v1487, %v1483
    %v1696 = vpack.c.b16 %v1488, %v1484
    %v1697 = vpack.c.b16 %v1489, %v1485
    %v1698 = vpack.c.b16 %v1490, %v1486
    %v1699 = vpack.c.b16 %v1495, %v1491
    %v1700 = vpack.c.b16 %v1496, %v1492
    %v1701 = vpack.c.b16 %v1497, %v1493
    %v1702 = vpack.c.b16 %v1498, %v1494
    %v1703 = vpack.c.b16 %v1503, %v1499
    %v1704 = vpack.c.b16 %v1504, %v1500
    %v1705 = vpack.c.b16 %v1505, %v1501
    %v1706 = vpack.c.b16 %v1506, %v1502
    %v1707 = vpack.c.b16 %v1511, %v1507
    %v1708 = vpack.c.b16 %v1512, %v1508
    %v1709 = vpack.c.b16 %v1513, %v1509
    %v1710 = vpack.c.b16 %v1514, %v1510
    %v1711 = vpack.c.b16 %v1519, %v1515
    %v1712 = vpack.c.b16 %v1520, %v1516
    %v1713 = vpack.c.b16 %v1521, %v1517
    %v1714 = vpack.c.b16 %v1522, %v1518
    %v1715 = vpack.c.b16 %v1527, %v1523
    %v1716 = vpack.c.b16 %v1528, %v1524
    %v1717 = vpack.c.b16 %v1529, %v1525
    %v1718 = vpack.c.b16 %v1530, %v1526
    %v1719 = vpack.c.b16 %v1535, %v1531
    %v1720 = vpack.c.b16 %v1536, %v1532
    %v1721 = vpack.c.b16 %v1537, %v1533
    %v1722 = vpack.c.b16 %v1538, %v1534
    %v1723 = vpack.c.b16 %v1543, %v1539
    %v1724 = vpack.c.b16 %v1544, %v1540
    %v1725 = vpack.c.b16 %v1545, %v1541
    %v1726 = vpack.c.b16 %v1546, %v1542
    %v1727 = vpack.c.b16 %v1551, %v1547
    %v1728 = vpack.c.b16 %v1552, %v1548
    %v1729 = vpack.c.b16 %v1553, %v1549
    %v1730 = vpack.c.b16 %v1554, %v1550
    %v1731 = vpack.c.b16 %v1559, %v1555
    %v1732 = vpack.c.b16 %v1560, %v1556
    %v1733 = vpack.c.b16 %v1561, %v1557
    %v1734 = vpack.c.b16 %v1562, %v1558
    %v1735 = vpack.c.b16 %v1567, %v1563
    %v1736 = vpack.c.b16 %v1568, %v1564
    %v1737 = vpack.c.b16 %v1569, %v1565
    %v1738 = vpack.c.b16 %v1570, %v1566
    %v1739 = vpack.c.b16 %v1575, %v1571
    %v1740 = vpack.c.b16 %v1576, %v1572
    %v1741 = vpack.c.b16 %v1577, %v1573
    %v1742 = vpack.c.b16 %v1578, %v1574
    %v1743 = vpack.c.b16 %v1583, %v1579
    %v1744 = vpack.c.b16 %v1584, %v1580
    %v1745 = vpack.c.b16 %v1585, %v1581
    %v1746 = vpack.c.b16 %v1586, %v1582
    %v1747 = vpack.c.b16 %v1591, %v1587
    %v1748 = vpack.c.b16 %v1592, %v1588
    %v1749 = vpack.c.b16 %v1593, %v1589
    %v1750 = vpack.c.b16 %v1594, %v1590
    %v1751 = vpack.c.b16 %v1599, %v1595
    %v1752 = vpack.c.b16 %v1600, %v1596
    %v1753 = vpack.c.b16 %v1601, %v1597
    %v1754 = vpack.c.b16 %v1602, %v1598
    %v1755 = vpack.c.b16 %v1607, %v1603
    %v1756 = vpack.c.b16 %v1608, %v1604
    %v1757 = vpack.c.b16 %v1609, %v1605
    %v1758 = vpack.c.b16 %v1610, %v1606
    %v1759 = vpack.c.b16 %v1615, %v1611
    %v1760 = vpack.c.b16 %v1616, %v1612
    %v1761 = vpack.c.b16 %v1617, %v1613
    %v1762 = vpack.c.b16 %v1618, %v1614
    %v1763 = vpack.c.b16 %v1623, %v1619
    %v1764 = vpack.c.b16 %v1624, %v1620
    %v1765 = vpack.c.b16 %v1625, %v1621
    %v1766 = vpack.c.b16 %v1626, %v1622
    %v1767 = vpack.c.b16 %v1631, %v1627
    %v1768 = vpack.c.b16 %v1632, %v1628
    %v1769 = vpack.c.b16 %v1633, %v1629
    %v1770 = vpack.c.b16 %v1634, %v1630
    %v1771 = vpack.c.b16 %v1639, %v1635
    %v1772 = vpack.c.b16 %v1640, %v1636
    %v1773 = vpack.c.b16 %v1641, %v1637
    %v1774 = vpack.c.b16 %v1642, %v1638
    %v1775 = vpack.c.b16 %v1647, %v1643
    %v1776 = vpack.c.b16 %v1648, %v1644
    %v1777 = vpack.c.b16 %v1649, %v1645
    %v1778 = vpack.c.b16 %v1650, %v1646
    %1907 = vmatprep.subr.bf16.mxu0 %v1652
    %1908 = vmatpush1.bf16.msra.mxu0 %v1651
    %1909 = vmatprep.subr.bf16.mxu0 %v1656
    %1910 = vmatpush1.bf16.msra.mxu0 %v1655
    %1911 = vmatprep.subr.bf16.mxu0 %v1660
    %1912 = vmatpush1.bf16.msra.mxu0 %v1659
    %1913 = vmatprep.subr.bf16.mxu0 %v1664
    %1914 = vmatpush1.bf16.msra.mxu0 %v1663
    %1915 = vmatprep.subr.bf16.mxu0 %v1668
    %1916 = vmatpush1.bf16.msra.mxu0 %v1667
    %1917 = vmatprep.subr.bf16.mxu0 %v1672
    %1918 = vmatpush1.bf16.msra.mxu0 %v1671
    %1919 = vmatprep.subr.bf16.mxu0 %v1676
    %1920 = vmatpush1.bf16.msra.mxu0 %v1675
    %1921 = vmatprep.subr.bf16.mxu0 %v1680
    %1922 = vmatpush1.bf16.msra.mxu0 %v1679
    %1923 = vmatprep.subr.bf16.mxu0 %v1684
    %1924 = vmatpush1.bf16.msra.mxu0 %v1683
    %1925 = vmatprep.subr.bf16.mxu0 %v1688
    %1926 = vmatpush1.bf16.msra.mxu0 %v1687
    %1927 = vmatprep.subr.bf16.mxu0 %v1692
    %1928 = vmatpush1.bf16.msra.mxu0 %v1691
    %1929 = vmatprep.subr.bf16.mxu0 %v1696
    %1930 = vmatpush1.bf16.msra.mxu0 %v1695
    %1931 = vmatprep.subr.bf16.mxu0 %v1700
    %1932 = vmatpush1.bf16.msra.mxu0 %v1699
    %1933 = vmatprep.subr.bf16.mxu0 %v1704
    %1934 = vmatpush1.bf16.msra.mxu0 %v1703
    %1935 = vmatprep.subr.bf16.mxu0 %v1708
    %1936 = vmatpush1.bf16.msra.mxu0 %v1707
    %1937 = vmatprep.subr.bf16.mxu0 %v1712
    %1938 = vmatpush1.bf16.msra.mxu0 %v1711
    %1939 = vmatprep.mubr.bf16.mxu0 %v110
    %1940 = vmatmul.mubr.bf16.gmra.mrb[0].mxu0 %v109
    %v1941 = vpop.f32.mrb[0].mxu0
    %v1942 = vadd.f32 %v1250, %v1941
    %v1943 = vpop.f32.mrb[0].mxu0
    %v1944 = vadd.f32 %v1254, %v1943
    %v1945 = vpop.f32.mrb[0].mxu0
    %v1946 = vadd.f32 %v1250, %v1945
    %v1947 = vpop.f32.mrb[0].mxu0
    %v1948 = vadd.f32 %v1254, %v1947
    %1949 = vdwg.mxu0
    %1950 = vmatprep.subr.bf16.mxu0 %v1716
    %1951 = vmatpush1.bf16.msra.mxu0 %v1715
    %1952 = vmatprep.subr.bf16.mxu0 %v1720
    %1953 = vmatpush1.bf16.msra.mxu0 %v1719
    %1954 = vmatprep.subr.bf16.mxu0 %v1724
    %1955 = vmatpush1.bf16.msra.mxu0 %v1723
    %1956 = vmatprep.subr.bf16.mxu0 %v1728
    %1957 = vmatpush1.bf16.msra.mxu0 %v1727
    %1958 = vmatprep.subr.bf16.mxu0 %v1732
    %1959 = vmatpush1.bf16.msra.mxu0 %v1731
    %1960 = vmatprep.subr.bf16.mxu0 %v1736
    %1961 = vmatpush1.bf16.msra.mxu0 %v1735
    %1962 = vmatprep.subr.bf16.mxu0 %v1740
    %1963 = vmatpush1.bf16.msra.mxu0 %v1739
    %1964 = vmatprep.subr.bf16.mxu0 %v1744
    %1965 = vmatpush1.bf16.msra.mxu0 %v1743
    %1966 = vmatprep.subr.bf16.mxu0 %v1748
    %1967 = vmatpush1.bf16.msra.mxu0 %v1747
    %1968 = vmatprep.subr.bf16.mxu0 %v1752
    %1969 = vmatpush1.bf16.msra.mxu0 %v1751
    %1970 = vmatprep.subr.bf16.mxu0 %v1756
    %1971 = vmatpush1.bf16.msra.mxu0 %v1755
    %1972 = vmatprep.subr.bf16.mxu0 %v1760
    %1973 = vmatpush1.bf16.msra.mxu0 %v1759
    %1974 = vmatprep.subr.bf16.mxu0 %v1764
    %1975 = vmatpush1.bf16.msra.mxu0 %v1763
    %1976 = vmatprep.subr.bf16.mxu0 %v1768
    %1977 = vmatpush1.bf16.msra.mxu0 %v1767
    %1978 = vmatprep.subr.bf16.mxu0 %v1772
    %1979 = vmatpush1.bf16.msra.mxu0 %v1771
    %1980 = vmatprep.subr.bf16.mxu0 %v1776
    %1981 = vmatpush1.bf16.msra.mxu0 %v1775
    %1982 = vmatprep.mubr.bf16.mxu0 %v112
    %1983 = vmatmul.mubr.bf16.gmra.mrb[0].mxu0 %v111
    %v1984 = vpop.f32.mrb[0].mxu0
    %v1985 = vadd.f32 %v1942, %v1984
    %v1986 = vpop.f32.mrb[0].mxu0
    %v1987 = vadd.f32 %v1944, %v1986
    %v1988 = vpop.f32.mrb[0].mxu0
    %v1989 = vadd.f32 %v1946, %v1988
    %v1990 = vpop.f32.mrb[0].mxu0
    %v1991 = vadd.f32 %v1948, %v1990
    %1992 = vdwg.mxu0
    %1993 = vmatprep.subr.bf16.mxu0 %v1654
    %1994 = vmatpush1.bf16.msra.mxu0 %v1653
    %1995 = vmatprep.subr.bf16.mxu0 %v1658
    %1996 = vmatpush1.bf16.msra.mxu0 %v1657
    %1997 = vmatprep.subr.bf16.mxu0 %v1662
    %1998 = vmatpush1.bf16.msra.mxu0 %v1661
    %1999 = vmatprep.subr.bf16.mxu0 %v1666
    %2000 = vmatpush1.bf16.msra.mxu0 %v1665
    %2001 = vmatprep.subr.bf16.mxu0 %v1670
    %2002 = vmatpush1.bf16.msra.mxu0 %v1669
    %2003 = vmatprep.subr.bf16.mxu0 %v1674
    %2004 = vmatpush1.bf16.msra.mxu0 %v1673
    %2005 = vmatprep.subr.bf16.mxu0 %v1678
    %2006 = vmatpush1.bf16.msra.mxu0 %v1677
    %2007 = vmatprep.subr.bf16.mxu0 %v1682
    %2008 = vmatpush1.bf16.msra.mxu0 %v1681
    %2009 = vmatprep.subr.bf16.mxu0 %v1686
    %2010 = vmatpush1.bf16.msra.mxu0 %v1685
    %2011 = vmatprep.subr.bf16.mxu0 %v1690
    %2012 = vmatpush1.bf16.msra.mxu0 %v1689
    %2013 = vmatprep.subr.bf16.mxu0 %v1694
    %2014 = vmatpush1.bf16.msra.mxu0 %v1693
    %2015 = vmatprep.subr.bf16.mxu0 %v1698
    %2016 = vmatpush1.bf16.msra.mxu0 %v1697
    %2017 = vmatprep.subr.bf16.mxu0 %v1702
    %2018 = vmatpush1.bf16.msra.mxu0 %v1701
    %2019 = vmatprep.subr.bf16.mxu0 %v1706
    %2020 = vmatpush1.bf16.msra.mxu0 %v1705
    %2021 = vmatprep.subr.bf16.mxu0 %v1710
    %2022 = vmatpush1.bf16.msra.mxu0 %v1709
    %2023 = vmatprep.subr.bf16.mxu0 %v1714
    %2024 = vmatpush1.bf16.msra.mxu0 %v1713
    %2025 = vmatprep.mubr.bf16.mxu0 %v110
    %2026 = vmatmul.mubr.bf16.gmra.mrb[0].mxu0 %v109
    %v2027 = vpop.f32.mrb[0].mxu0
    %v2028 = vadd.f32 %v1258, %v2027
    %v2029 = vpop.f32.mrb[0].mxu0
    %v2030 = vadd.f32 %v1262, %v2029
    %v2031 = vpop.f32.mrb[0].mxu0
    %v2032 = vadd.f32 %v1258, %v2031
    %v2033 = vpop.f32.mrb[0].mxu0
    %v2034 = vadd.f32 %v1262, %v2033
    %2035 = vdwg.mxu0
    %2036 = vmatprep.subr.bf16.mxu0 %v1718
    %2037 = vmatpush1.bf16.msra.mxu0 %v1717
    %2038 = vmatprep.subr.bf16.mxu0 %v1722
    %2039 = vmatpush1.bf16.msra.mxu0 %v1721
    %2040 = vmatprep.subr.bf16.mxu0 %v1726
    %2041 = vmatpush1.bf16.msra.mxu0 %v1725
    %2042 = vmatprep.subr.bf16.mxu0 %v1730
    %2043 = vmatpush1.bf16.msra.mxu0 %v1729
    %2044 = vmatprep.subr.bf16.mxu0 %v1734
    %2045 = vmatpush1.bf16.msra.mxu0 %v1733
    %2046 = vmatprep.subr.bf16.mxu0 %v1738
    %2047 = vmatpush1.bf16.msra.mxu0 %v1737
    %2048 = vmatprep.subr.bf16.mxu0 %v1742
    %2049 = vmatpush1.bf16.msra.mxu0 %v1741
    %2050 = vmatprep.subr.bf16.mxu0 %v1746
    %2051 = vmatpush1.bf16.msra.mxu0 %v1745
    %2052 = vmatprep.subr.bf16.mxu0 %v1750
    %2053 = vmatpush1.bf16.msra.mxu0 %v1749
    %2054 = vmatprep.subr.bf16.mxu0 %v1754
    %2055 = vmatpush1.bf16.msra.mxu0 %v1753
    %2056 = vmatprep.subr.bf16.mxu0 %v1758
    %2057 = vmatpush1.bf16.msra.mxu0 %v1757
    %2058 = vmatprep.subr.bf16.mxu0 %v1762
    %2059 = vmatpush1.bf16.msra.mxu0 %v1761
    %2060 = vmatprep.subr.bf16.mxu0 %v1766
    %2061 = vmatpush1.bf16.msra.mxu0 %v1765
    %2062 = vmatprep.subr.bf16.mxu0 %v1770
    %2063 = vmatpush1.bf16.msra.mxu0 %v1769
    %2064 = vmatprep.subr.bf16.mxu0 %v1774
    %2065 = vmatpush1.bf16.msra.mxu0 %v1773
    %2066 = vmatprep.subr.bf16.mxu0 %v1778
    %2067 = vmatpush1.bf16.msra.mxu0 %v1777
    %2068 = vmatprep.mubr.bf16.mxu0 %v112
    %2069 = vmatmul.mubr.bf16.gmra.mrb[0].mxu0 %v111
    %v2070 = vpop.f32.mrb[0].mxu0
    %v2071 = vadd.f32 %v2028, %v2070
    %v2072 = vpop.f32.mrb[0].mxu0
    %v2073 = vadd.f32 %v2030, %v2072
    %v2074 = vpop.f32.mrb[0].mxu0
    %v2075 = vadd.f32 %v2032, %v2074
    %v2076 = vpop.f32.mrb[0].mxu0
    %v2077 = vadd.f32 %v2034, %v2076
    %2078 = vdwg.mxu0
    %v2079 = vpack.c.bf16 %v1989, %v1985
    %v2080 = vpack.c.bf16 %v1991, %v1987
    %v2081 = vpack.c.bf16 %v2075, %v2071
    %v2082 = vpack.c.bf16 %v2077, %v2073
    %v2087 = vunpack.c.l.b16 %v2079
    %v2088 = vunpack.c.l.b16 %v2080
    %v2089 = vunpack.c.l.b16 %v2081
    %v2090 = vunpack.c.l.b16 %v2082
    %v2091 = vunpack.c.h.b16 %v2079
    %v2092 = vunpack.c.h.b16 %v2080
    %v2093 = vunpack.c.h.b16 %v2081
    %v2094 = vunpack.c.h.b16 %v2082
    %v2095 = vpack.c.b16 %v2088, %v2087
    %v2096 = vpack.c.b16 %v2090, %v2089
    %v2097 = vpack.c.b16 %v2092, %v2091
    %v2098 = vpack.c.b16 %v2094, %v2093
    %s2103 = scalar_lea.vmem [#allocation11], 32
    %2104 = vst [vmem:[%s2103] sm:$0xff] %v2095
    %2105 = vst [vmem:[%s2103 + $0x8] sm:$0xff] %v2096
    %2106 = vst [vmem:[%s2103 + $0x10] sm:$0xff] %v2097
    %2107 = vst [vmem:[%s2103 + $0x18] sm:$0xff] %v2098
    %s2108 = scalar_lea.vmem [#allocation8], 2048
    %v2109 = vld [vmem:[%s2108] sm:$0xff]
    %v2110 = vld [vmem:[%s2108 + $0x8] sm:$0xff]
    %v2111 = vld [vmem:[%s2108 + $0x10] sm:$0xff]
    %v2112 = vld [vmem:[%s2108 + $0x18] sm:$0xff]
    %v2113 = vld [vmem:[%s2108 + $0x20] sm:$0xff]
    %v2114 = vld [vmem:[%s2108 + $0x28] sm:$0xff]
    %v2115 = vld [vmem:[%s2108 + $0x30] sm:$0xff]
    %v2116 = vld [vmem:[%s2108 + $0x38] sm:$0xff]
    %v2117 = vld [vmem:[%s2108 + $0x40] sm:$0xff]
    %v2118 = vld [vmem:[%s2108 + $0x48] sm:$0xff]
    %v2119 = vld [vmem:[%s2108 + $0x50] sm:$0xff]
    %v2120 = vld [vmem:[%s2108 + $0x58] sm:$0xff]
    %v2121 = vld [vmem:[%s2108 + $0x60] sm:$0xff]
    %v2122 = vld [vmem:[%s2108 + $0x68] sm:$0xff]
    %v2123 = vld [vmem:[%s2108 + $0x70] sm:$0xff]
    %v2124 = vld [vmem:[%s2108 + $0x78] sm:$0xff]
    %v2125 = vld [vmem:[%s2108 + $0x80] sm:$0xff]
    %v2126 = vld [vmem:[%s2108 + $0x88] sm:$0xff]
    %v2127 = vld [vmem:[%s2108 + $0x90] sm:$0xff]
    %v2128 = vld [vmem:[%s2108 + $0x98] sm:$0xff]
    %v2129 = vld [vmem:[%s2108 + $0xa0] sm:$0xff]
    %v2130 = vld [vmem:[%s2108 + $0xa8] sm:$0xff]
    %v2131 = vld [vmem:[%s2108 + $0xb0] sm:$0xff]
    %v2132 = vld [vmem:[%s2108 + $0xb8] sm:$0xff]
    %v2133 = vld [vmem:[%s2108 + $0xc0] sm:$0xff]
    %v2134 = vld [vmem:[%s2108 + $0xc8] sm:$0xff]
    %v2135 = vld [vmem:[%s2108 + $0xd0] sm:$0xff]
    %v2136 = vld [vmem:[%s2108 + $0xd8] sm:$0xff]
    %v2137 = vld [vmem:[%s2108 + $0xe0] sm:$0xff]
    %v2138 = vld [vmem:[%s2108 + $0xe8] sm:$0xff]
    %v2139 = vld [vmem:[%s2108 + $0xf0] sm:$0xff]
    %v2140 = vld [vmem:[%s2108 + $0xf8] sm:$0xff]
    %v2141 = vld [vmem:[%s2108 + $0x100] sm:$0xff]
    %v2142 = vld [vmem:[%s2108 + $0x108] sm:$0xff]
    %v2143 = vld [vmem:[%s2108 + $0x110] sm:$0xff]
    %v2144 = vld [vmem:[%s2108 + $0x118] sm:$0xff]
    %v2145 = vld [vmem:[%s2108 + $0x120] sm:$0xff]
    %v2146 = vld [vmem:[%s2108 + $0x128] sm:$0xff]
    %v2147 = vld [vmem:[%s2108 + $0x130] sm:$0xff]
    %v2148 = vld [vmem:[%s2108 + $0x138] sm:$0xff]
    %v2149 = vld [vmem:[%s2108 + $0x140] sm:$0xff]
    %v2150 = vld [vmem:[%s2108 + $0x148] sm:$0xff]
    %v2151 = vld [vmem:[%s2108 + $0x150] sm:$0xff]
    %v2152 = vld [vmem:[%s2108 + $0x158] sm:$0xff]
    %v2153 = vld [vmem:[%s2108 + $0x160] sm:$0xff]
    %v2154 = vld [vmem:[%s2108 + $0x168] sm:$0xff]
    %v2155 = vld [vmem:[%s2108 + $0x170] sm:$0xff]
    %v2156 = vld [vmem:[%s2108 + $0x178] sm:$0xff]
    %v2157 = vld [vmem:[%s2108 + $0x180] sm:$0xff]
    %v2158 = vld [vmem:[%s2108 + $0x188] sm:$0xff]
    %v2159 = vld [vmem:[%s2108 + $0x190] sm:$0xff]
    %v2160 = vld [vmem:[%s2108 + $0x198] sm:$0xff]
    %v2161 = vld [vmem:[%s2108 + $0x1a0] sm:$0xff]
    %v2162 = vld [vmem:[%s2108 + $0x1a8] sm:$0xff]
    %v2163 = vld [vmem:[%s2108 + $0x1b0] sm:$0xff]
    %v2164 = vld [vmem:[%s2108 + $0x1b8] sm:$0xff]
    %v2165 = vld [vmem:[%s2108 + $0x1c0] sm:$0xff]
    %v2166 = vld [vmem:[%s2108 + $0x1c8] sm:$0xff]
    %v2167 = vld [vmem:[%s2108 + $0x1d0] sm:$0xff]
    %v2168 = vld [vmem:[%s2108 + $0x1d8] sm:$0xff]
    %v2169 = vld [vmem:[%s2108 + $0x1e0] sm:$0xff]
    %v2170 = vld [vmem:[%s2108 + $0x1e8] sm:$0xff]
    %v2171 = vld [vmem:[%s2108 + $0x1f0] sm:$0xff]
    %v2172 = vld [vmem:[%s2108 + $0x1f8] sm:$0xff]
    %v2173 = vld [vmem:[%s2108 + $0x200] sm:$0xff]
    %v2174 = vld [vmem:[%s2108 + $0x208] sm:$0xff]
    %v2175 = vld [vmem:[%s2108 + $0x210] sm:$0xff]
    %v2176 = vld [vmem:[%s2108 + $0x218] sm:$0xff]
    %v2177 = vld [vmem:[%s2108 + $0x220] sm:$0xff]
    %v2178 = vld [vmem:[%s2108 + $0x228] sm:$0xff]
    %v2179 = vld [vmem:[%s2108 + $0x230] sm:$0xff]
    %v2180 = vld [vmem:[%s2108 + $0x238] sm:$0xff]
    %v2181 = vld [vmem:[%s2108 + $0x240] sm:$0xff]
    %v2182 = vld [vmem:[%s2108 + $0x248] sm:$0xff]
    %v2183 = vld [vmem:[%s2108 + $0x250] sm:$0xff]
    %v2184 = vld [vmem:[%s2108 + $0x258] sm:$0xff]
    %v2185 = vld [vmem:[%s2108 + $0x260] sm:$0xff]
    %v2186 = vld [vmem:[%s2108 + $0x268] sm:$0xff]
    %v2187 = vld [vmem:[%s2108 + $0x270] sm:$0xff]
    %v2188 = vld [vmem:[%s2108 + $0x278] sm:$0xff]
    %v2189 = vld [vmem:[%s2108 + $0x280] sm:$0xff]
    %v2190 = vld [vmem:[%s2108 + $0x288] sm:$0xff]
    %v2191 = vld [vmem:[%s2108 + $0x290] sm:$0xff]
    %v2192 = vld [vmem:[%s2108 + $0x298] sm:$0xff]
    %v2193 = vld [vmem:[%s2108 + $0x2a0] sm:$0xff]
    %v2194 = vld [vmem:[%s2108 + $0x2a8] sm:$0xff]
    %v2195 = vld [vmem:[%s2108 + $0x2b0] sm:$0xff]
    %v2196 = vld [vmem:[%s2108 + $0x2b8] sm:$0xff]
    %v2197 = vld [vmem:[%s2108 + $0x2c0] sm:$0xff]
    %v2198 = vld [vmem:[%s2108 + $0x2c8] sm:$0xff]
    %v2199 = vld [vmem:[%s2108 + $0x2d0] sm:$0xff]
    %v2200 = vld [vmem:[%s2108 + $0x2d8] sm:$0xff]
    %v2201 = vld [vmem:[%s2108 + $0x2e0] sm:$0xff]
    %v2202 = vld [vmem:[%s2108 + $0x2e8] sm:$0xff]
    %v2203 = vld [vmem:[%s2108 + $0x2f0] sm:$0xff]
    %v2204 = vld [vmem:[%s2108 + $0x2f8] sm:$0xff]
    %v2205 = vld [vmem:[%s2108 + $0x300] sm:$0xff]
    %v2206 = vld [vmem:[%s2108 + $0x308] sm:$0xff]
    %v2207 = vld [vmem:[%s2108 + $0x310] sm:$0xff]
    %v2208 = vld [vmem:[%s2108 + $0x318] sm:$0xff]
    %v2209 = vld [vmem:[%s2108 + $0x320] sm:$0xff]
    %v2210 = vld [vmem:[%s2108 + $0x328] sm:$0xff]
    %v2211 = vld [vmem:[%s2108 + $0x330] sm:$0xff]
    %v2212 = vld [vmem:[%s2108 + $0x338] sm:$0xff]
    %v2213 = vld [vmem:[%s2108 + $0x340] sm:$0xff]
    %v2214 = vld [vmem:[%s2108 + $0x348] sm:$0xff]
    %v2215 = vld [vmem:[%s2108 + $0x350] sm:$0xff]
    %v2216 = vld [vmem:[%s2108 + $0x358] sm:$0xff]
    %v2217 = vld [vmem:[%s2108 + $0x360] sm:$0xff]
    %v2218 = vld [vmem:[%s2108 + $0x368] sm:$0xff]
    %v2219 = vld [vmem:[%s2108 + $0x370] sm:$0xff]
    %v2220 = vld [vmem:[%s2108 + $0x378] sm:$0xff]
    %v2221 = vld [vmem:[%s2108 + $0x380] sm:$0xff]
    %v2222 = vld [vmem:[%s2108 + $0x388] sm:$0xff]
    %v2223 = vld [vmem:[%s2108 + $0x390] sm:$0xff]
    %v2224 = vld [vmem:[%s2108 + $0x398] sm:$0xff]
    %v2225 = vld [vmem:[%s2108 + $0x3a0] sm:$0xff]
    %v2226 = vld [vmem:[%s2108 + $0x3a8] sm:$0xff]
    %v2227 = vld [vmem:[%s2108 + $0x3b0] sm:$0xff]
    %v2228 = vld [vmem:[%s2108 + $0x3b8] sm:$0xff]
    %v2229 = vld [vmem:[%s2108 + $0x3c0] sm:$0xff]
    %v2230 = vld [vmem:[%s2108 + $0x3c8] sm:$0xff]
    %v2231 = vld [vmem:[%s2108 + $0x3d0] sm:$0xff]
    %v2232 = vld [vmem:[%s2108 + $0x3d8] sm:$0xff]
    %v2233 = vld [vmem:[%s2108 + $0x3e0] sm:$0xff]
    %v2234 = vld [vmem:[%s2108 + $0x3e8] sm:$0xff]
    %v2235 = vld [vmem:[%s2108 + $0x3f0] sm:$0xff]
    %v2236 = vld [vmem:[%s2108 + $0x3f8] sm:$0xff]
    %s2237 = scalar_lea.vmem [#allocation10], 8
    %v2238 = vld [vmem:[%s2237] sm:$0xf]
    %v2240 = vlaneseq
    %v2241 = vshrl.u32 %v2240, 7
    %v2242 = vsub.s32 0, %v2241
    %v2243 = vrot.slane %v2238, %v2242
    %v2244 = vlaneseq
    %v2245 = vshrl.u32 %v2244, 7
    %v2246 = vsub.s32 1, %v2245
    %v2247 = vrot.slane %v2238, %v2246
    %v2248 = vlaneseq
    %v2249 = vshrl.u32 %v2248, 7
    %v2250 = vsub.s32 2, %v2249
    %v2251 = vrot.slane %v2238, %v2250
    %v2252 = vlaneseq
    %v2253 = vshrl.u32 %v2252, 7
    %v2254 = vsub.s32 3, %v2253
    %v2255 = vrot.slane %v2238, %v2254
    %v2388 = vunpack.c.l.b16 %v2109
    %v2389 = vunpack.c.h.b16 %v2109
    %v2390 = vunpack.c.l.b16 %v2110
    %v2391 = vunpack.c.h.b16 %v2110
    %v2392 = vunpack.c.l.b16 %v2111
    %v2393 = vunpack.c.h.b16 %v2111
    %v2394 = vunpack.c.l.b16 %v2112
    %v2395 = vunpack.c.h.b16 %v2112
    %v2396 = vunpack.c.l.b16 %v2113
    %v2397 = vunpack.c.h.b16 %v2113
    %v2398 = vunpack.c.l.b16 %v2114
    %v2399 = vunpack.c.h.b16 %v2114
    %v2400 = vunpack.c.l.b16 %v2115
    %v2401 = vunpack.c.h.b16 %v2115
    %v2402 = vunpack.c.l.b16 %v2116
    %v2403 = vunpack.c.h.b16 %v2116
    %v2404 = vunpack.c.l.b16 %v2117
    %v2405 = vunpack.c.h.b16 %v2117
    %v2406 = vunpack.c.l.b16 %v2118
    %v2407 = vunpack.c.h.b16 %v2118
    %v2408 = vunpack.c.l.b16 %v2119
    %v2409 = vunpack.c.h.b16 %v2119
    %v2410 = vunpack.c.l.b16 %v2120
    %v2411 = vunpack.c.h.b16 %v2120
    %v2412 = vunpack.c.l.b16 %v2121
    %v2413 = vunpack.c.h.b16 %v2121
    %v2414 = vunpack.c.l.b16 %v2122
    %v2415 = vunpack.c.h.b16 %v2122
    %v2416 = vunpack.c.l.b16 %v2123
    %v2417 = vunpack.c.h.b16 %v2123
    %v2418 = vunpack.c.l.b16 %v2124
    %v2419 = vunpack.c.h.b16 %v2124
    %v2420 = vunpack.c.l.b16 %v2125
    %v2421 = vunpack.c.h.b16 %v2125
    %v2422 = vunpack.c.l.b16 %v2126
    %v2423 = vunpack.c.h.b16 %v2126
    %v2424 = vunpack.c.l.b16 %v2127
    %v2425 = vunpack.c.h.b16 %v2127
    %v2426 = vunpack.c.l.b16 %v2128
    %v2427 = vunpack.c.h.b16 %v2128
    %v2428 = vunpack.c.l.b16 %v2129
    %v2429 = vunpack.c.h.b16 %v2129
    %v2430 = vunpack.c.l.b16 %v2130
    %v2431 = vunpack.c.h.b16 %v2130
    %v2432 = vunpack.c.l.b16 %v2131
    %v2433 = vunpack.c.h.b16 %v2131
    %v2434 = vunpack.c.l.b16 %v2132
    %v2435 = vunpack.c.h.b16 %v2132
    %v2436 = vunpack.c.l.b16 %v2133
    %v2437 = vunpack.c.h.b16 %v2133
    %v2438 = vunpack.c.l.b16 %v2134
    %v2439 = vunpack.c.h.b16 %v2134
    %v2440 = vunpack.c.l.b16 %v2135
    %v2441 = vunpack.c.h.b16 %v2135
    %v2442 = vunpack.c.l.b16 %v2136
    %v2443 = vunpack.c.h.b16 %v2136
    %v2444 = vunpack.c.l.b16 %v2137
    %v2445 = vunpack.c.h.b16 %v2137
    %v2446 = vunpack.c.l.b16 %v2138
    %v2447 = vunpack.c.h.b16 %v2138
    %v2448 = vunpack.c.l.b16 %v2139
    %v2449 = vunpack.c.h.b16 %v2139
    %v2450 = vunpack.c.l.b16 %v2140
    %v2451 = vunpack.c.h.b16 %v2140
    %v2452 = vunpack.c.l.b16 %v2141
    %v2453 = vunpack.c.h.b16 %v2141
    %v2454 = vunpack.c.l.b16 %v2142
    %v2455 = vunpack.c.h.b16 %v2142
    %v2456 = vunpack.c.l.b16 %v2143
    %v2457 = vunpack.c.h.b16 %v2143
    %v2458 = vunpack.c.l.b16 %v2144
    %v2459 = vunpack.c.h.b16 %v2144
    %v2460 = vunpack.c.l.b16 %v2145
    %v2461 = vunpack.c.h.b16 %v2145
    %v2462 = vunpack.c.l.b16 %v2146
    %v2463 = vunpack.c.h.b16 %v2146
    %v2464 = vunpack.c.l.b16 %v2147
    %v2465 = vunpack.c.h.b16 %v2147
    %v2466 = vunpack.c.l.b16 %v2148
    %v2467 = vunpack.c.h.b16 %v2148
    %v2468 = vunpack.c.l.b16 %v2149
    %v2469 = vunpack.c.h.b16 %v2149
    %v2470 = vunpack.c.l.b16 %v2150
    %v2471 = vunpack.c.h.b16 %v2150
    %v2472 = vunpack.c.l.b16 %v2151
    %v2473 = vunpack.c.h.b16 %v2151
    %v2474 = vunpack.c.l.b16 %v2152
    %v2475 = vunpack.c.h.b16 %v2152
    %v2476 = vunpack.c.l.b16 %v2153
    %v2477 = vunpack.c.h.b16 %v2153
    %v2478 = vunpack.c.l.b16 %v2154
    %v2479 = vunpack.c.h.b16 %v2154
    %v2480 = vunpack.c.l.b16 %v2155
    %v2481 = vunpack.c.h.b16 %v2155
    %v2482 = vunpack.c.l.b16 %v2156
    %v2483 = vunpack.c.h.b16 %v2156
    %v2484 = vunpack.c.l.b16 %v2157
    %v2485 = vunpack.c.h.b16 %v2157
    %v2486 = vunpack.c.l.b16 %v2158
    %v2487 = vunpack.c.h.b16 %v2158
    %v2488 = vunpack.c.l.b16 %v2159
    %v2489 = vunpack.c.h.b16 %v2159
    %v2490 = vunpack.c.l.b16 %v2160
    %v2491 = vunpack.c.h.b16 %v2160
    %v2492 = vunpack.c.l.b16 %v2161
    %v2493 = vunpack.c.h.b16 %v2161
    %v2494 = vunpack.c.l.b16 %v2162
    %v2495 = vunpack.c.h.b16 %v2162
    %v2496 = vunpack.c.l.b16 %v2163
    %v2497 = vunpack.c.h.b16 %v2163
    %v2498 = vunpack.c.l.b16 %v2164
    %v2499 = vunpack.c.h.b16 %v2164
    %v2500 = vunpack.c.l.b16 %v2165
    %v2501 = vunpack.c.h.b16 %v2165
    %v2502 = vunpack.c.l.b16 %v2166
    %v2503 = vunpack.c.h.b16 %v2166
    %v2504 = vunpack.c.l.b16 %v2167
    %v2505 = vunpack.c.h.b16 %v2167
    %v2506 = vunpack.c.l.b16 %v2168
    %v2507 = vunpack.c.h.b16 %v2168
    %v2508 = vunpack.c.l.b16 %v2169
    %v2509 = vunpack.c.h.b16 %v2169
    %v2510 = vunpack.c.l.b16 %v2170
    %v2511 = vunpack.c.h.b16 %v2170
    %v2512 = vunpack.c.l.b16 %v2171
    %v2513 = vunpack.c.h.b16 %v2171
    %v2514 = vunpack.c.l.b16 %v2172
    %v2515 = vunpack.c.h.b16 %v2172
    %v2516 = vunpack.c.l.b16 %v2173
    %v2517 = vunpack.c.h.b16 %v2173
    %v2518 = vunpack.c.l.b16 %v2174
    %v2519 = vunpack.c.h.b16 %v2174
    %v2520 = vunpack.c.l.b16 %v2175
    %v2521 = vunpack.c.h.b16 %v2175
    %v2522 = vunpack.c.l.b16 %v2176
    %v2523 = vunpack.c.h.b16 %v2176
    %v2524 = vunpack.c.l.b16 %v2177
    %v2525 = vunpack.c.h.b16 %v2177
    %v2526 = vunpack.c.l.b16 %v2178
    %v2527 = vunpack.c.h.b16 %v2178
    %v2528 = vunpack.c.l.b16 %v2179
    %v2529 = vunpack.c.h.b16 %v2179
    %v2530 = vunpack.c.l.b16 %v2180
    %v2531 = vunpack.c.h.b16 %v2180
    %v2532 = vunpack.c.l.b16 %v2181
    %v2533 = vunpack.c.h.b16 %v2181
    %v2534 = vunpack.c.l.b16 %v2182
    %v2535 = vunpack.c.h.b16 %v2182
    %v2536 = vunpack.c.l.b16 %v2183
    %v2537 = vunpack.c.h.b16 %v2183
    %v2538 = vunpack.c.l.b16 %v2184
    %v2539 = vunpack.c.h.b16 %v2184
    %v2540 = vunpack.c.l.b16 %v2185
    %v2541 = vunpack.c.h.b16 %v2185
    %v2542 = vunpack.c.l.b16 %v2186
    %v2543 = vunpack.c.h.b16 %v2186
    %v2544 = vunpack.c.l.b16 %v2187
    %v2545 = vunpack.c.h.b16 %v2187
    %v2546 = vunpack.c.l.b16 %v2188
    %v2547 = vunpack.c.h.b16 %v2188
    %v2548 = vunpack.c.l.b16 %v2189
    %v2549 = vunpack.c.h.b16 %v2189
    %v2550 = vunpack.c.l.b16 %v2190
    %v2551 = vunpack.c.h.b16 %v2190
    %v2552 = vunpack.c.l.b16 %v2191
    %v2553 = vunpack.c.h.b16 %v2191
    %v2554 = vunpack.c.l.b16 %v2192
    %v2555 = vunpack.c.h.b16 %v2192
    %v2556 = vunpack.c.l.b16 %v2193
    %v2557 = vunpack.c.h.b16 %v2193
    %v2558 = vunpack.c.l.b16 %v2194
    %v2559 = vunpack.c.h.b16 %v2194
    %v2560 = vunpack.c.l.b16 %v2195
    %v2561 = vunpack.c.h.b16 %v2195
    %v2562 = vunpack.c.l.b16 %v2196
    %v2563 = vunpack.c.h.b16 %v2196
    %v2564 = vunpack.c.l.b16 %v2197
    %v2565 = vunpack.c.h.b16 %v2197
    %v2566 = vunpack.c.l.b16 %v2198
    %v2567 = vunpack.c.h.b16 %v2198
    %v2568 = vunpack.c.l.b16 %v2199
    %v2569 = vunpack.c.h.b16 %v2199
    %v2570 = vunpack.c.l.b16 %v2200
    %v2571 = vunpack.c.h.b16 %v2200
    %v2572 = vunpack.c.l.b16 %v2201
    %v2573 = vunpack.c.h.b16 %v2201
    %v2574 = vunpack.c.l.b16 %v2202
    %v2575 = vunpack.c.h.b16 %v2202
    %v2576 = vunpack.c.l.b16 %v2203
    %v2577 = vunpack.c.h.b16 %v2203
    %v2578 = vunpack.c.l.b16 %v2204
    %v2579 = vunpack.c.h.b16 %v2204
    %v2580 = vunpack.c.l.b16 %v2205
    %v2581 = vunpack.c.h.b16 %v2205
    %v2582 = vunpack.c.l.b16 %v2206
    %v2583 = vunpack.c.h.b16 %v2206
    %v2584 = vunpack.c.l.b16 %v2207
    %v2585 = vunpack.c.h.b16 %v2207
    %v2586 = vunpack.c.l.b16 %v2208
    %v2587 = vunpack.c.h.b16 %v2208
    %v2588 = vunpack.c.l.b16 %v2209
    %v2589 = vunpack.c.h.b16 %v2209
    %v2590 = vunpack.c.l.b16 %v2210
    %v2591 = vunpack.c.h.b16 %v2210
    %v2592 = vunpack.c.l.b16 %v2211
    %v2593 = vunpack.c.h.b16 %v2211
    %v2594 = vunpack.c.l.b16 %v2212
    %v2595 = vunpack.c.h.b16 %v2212
    %v2596 = vunpack.c.l.b16 %v2213
    %v2597 = vunpack.c.h.b16 %v2213
    %v2598 = vunpack.c.l.b16 %v2214
    %v2599 = vunpack.c.h.b16 %v2214
    %v2600 = vunpack.c.l.b16 %v2215
    %v2601 = vunpack.c.h.b16 %v2215
    %v2602 = vunpack.c.l.b16 %v2216
    %v2603 = vunpack.c.h.b16 %v2216
    %v2604 = vunpack.c.l.b16 %v2217
    %v2605 = vunpack.c.h.b16 %v2217
    %v2606 = vunpack.c.l.b16 %v2218
    %v2607 = vunpack.c.h.b16 %v2218
    %v2608 = vunpack.c.l.b16 %v2219
    %v2609 = vunpack.c.h.b16 %v2219
    %v2610 = vunpack.c.l.b16 %v2220
    %v2611 = vunpack.c.h.b16 %v2220
    %v2612 = vunpack.c.l.b16 %v2221
    %v2613 = vunpack.c.h.b16 %v2221
    %v2614 = vunpack.c.l.b16 %v2222
    %v2615 = vunpack.c.h.b16 %v2222
    %v2616 = vunpack.c.l.b16 %v2223
    %v2617 = vunpack.c.h.b16 %v2223
    %v2618 = vunpack.c.l.b16 %v2224
    %v2619 = vunpack.c.h.b16 %v2224
    %v2620 = vunpack.c.l.b16 %v2225
    %v2621 = vunpack.c.h.b16 %v2225
    %v2622 = vunpack.c.l.b16 %v2226
    %v2623 = vunpack.c.h.b16 %v2226
    %v2624 = vunpack.c.l.b16 %v2227
    %v2625 = vunpack.c.h.b16 %v2227
    %v2626 = vunpack.c.l.b16 %v2228
    %v2627 = vunpack.c.h.b16 %v2228
    %v2628 = vunpack.c.l.b16 %v2229
    %v2629 = vunpack.c.h.b16 %v2229
    %v2630 = vunpack.c.l.b16 %v2230
    %v2631 = vunpack.c.h.b16 %v2230
    %v2632 = vunpack.c.l.b16 %v2231
    %v2633 = vunpack.c.h.b16 %v2231
    %v2634 = vunpack.c.l.b16 %v2232
    %v2635 = vunpack.c.h.b16 %v2232
    %v2636 = vunpack.c.l.b16 %v2233
    %v2637 = vunpack.c.h.b16 %v2233
    %v2638 = vunpack.c.l.b16 %v2234
    %v2639 = vunpack.c.h.b16 %v2234
    %v2640 = vunpack.c.l.b16 %v2235
    %v2641 = vunpack.c.h.b16 %v2235
    %v2642 = vunpack.c.l.b16 %v2236
    %v2643 = vunpack.c.h.b16 %v2236
    %v2644 = vpack.c.b16 %v2392, %v2388
    %v2645 = vpack.c.b16 %v2393, %v2389
    %v2646 = vpack.c.b16 %v2394, %v2390
    %v2647 = vpack.c.b16 %v2395, %v2391
    %v2648 = vpack.c.b16 %v2400, %v2396
    %v2649 = vpack.c.b16 %v2401, %v2397
    %v2650 = vpack.c.b16 %v2402, %v2398
    %v2651 = vpack.c.b16 %v2403, %v2399
    %v2652 = vpack.c.b16 %v2408, %v2404
    %v2653 = vpack.c.b16 %v2409, %v2405
    %v2654 = vpack.c.b16 %v2410, %v2406
    %v2655 = vpack.c.b16 %v2411, %v2407
    %v2656 = vpack.c.b16 %v2416, %v2412
    %v2657 = vpack.c.b16 %v2417, %v2413
    %v2658 = vpack.c.b16 %v2418, %v2414
    %v2659 = vpack.c.b16 %v2419, %v2415
    %v2660 = vpack.c.b16 %v2424, %v2420
    %v2661 = vpack.c.b16 %v2425, %v2421
    %v2662 = vpack.c.b16 %v2426, %v2422
    %v2663 = vpack.c.b16 %v2427, %v2423
    %v2664 = vpack.c.b16 %v2432, %v2428
    %v2665 = vpack.c.b16 %v2433, %v2429
    %v2666 = vpack.c.b16 %v2434, %v2430
    %v2667 = vpack.c.b16 %v2435, %v2431
    %v2668 = vpack.c.b16 %v2440, %v2436
    %v2669 = vpack.c.b16 %v2441, %v2437
    %v2670 = vpack.c.b16 %v2442, %v2438
    %v2671 = vpack.c.b16 %v2443, %v2439
    %v2672 = vpack.c.b16 %v2448, %v2444
    %v2673 = vpack.c.b16 %v2449, %v2445
    %v2674 = vpack.c.b16 %v2450, %v2446
    %v2675 = vpack.c.b16 %v2451, %v2447
    %v2676 = vpack.c.b16 %v2456, %v2452
    %v2677 = vpack.c.b16 %v2457, %v2453
    %v2678 = vpack.c.b16 %v2458, %v2454
    %v2679 = vpack.c.b16 %v2459, %v2455
    %v2680 = vpack.c.b16 %v2464, %v2460
    %v2681 = vpack.c.b16 %v2465, %v2461
    %v2682 = vpack.c.b16 %v2466, %v2462
    %v2683 = vpack.c.b16 %v2467, %v2463
    %v2684 = vpack.c.b16 %v2472, %v2468
    %v2685 = vpack.c.b16 %v2473, %v2469
    %v2686 = vpack.c.b16 %v2474, %v2470
    %v2687 = vpack.c.b16 %v2475, %v2471
    %v2688 = vpack.c.b16 %v2480, %v2476
    %v2689 = vpack.c.b16 %v2481, %v2477
    %v2690 = vpack.c.b16 %v2482, %v2478
    %v2691 = vpack.c.b16 %v2483, %v2479
    %v2692 = vpack.c.b16 %v2488, %v2484
    %v2693 = vpack.c.b16 %v2489, %v2485
    %v2694 = vpack.c.b16 %v2490, %v2486
    %v2695 = vpack.c.b16 %v2491, %v2487
    %v2696 = vpack.c.b16 %v2496, %v2492
    %v2697 = vpack.c.b16 %v2497, %v2493
    %v2698 = vpack.c.b16 %v2498, %v2494
    %v2699 = vpack.c.b16 %v2499, %v2495
    %v2700 = vpack.c.b16 %v2504, %v2500
    %v2701 = vpack.c.b16 %v2505, %v2501
    %v2702 = vpack.c.b16 %v2506, %v2502
    %v2703 = vpack.c.b16 %v2507, %v2503
    %v2704 = vpack.c.b16 %v2512, %v2508
    %v2705 = vpack.c.b16 %v2513, %v2509
    %v2706 = vpack.c.b16 %v2514, %v2510
    %v2707 = vpack.c.b16 %v2515, %v2511
    %v2708 = vpack.c.b16 %v2520, %v2516
    %v2709 = vpack.c.b16 %v2521, %v2517
    %v2710 = vpack.c.b16 %v2522, %v2518
    %v2711 = vpack.c.b16 %v2523, %v2519
    %v2712 = vpack.c.b16 %v2528, %v2524
    %v2713 = vpack.c.b16 %v2529, %v2525
    %v2714 = vpack.c.b16 %v2530, %v2526
    %v2715 = vpack.c.b16 %v2531, %v2527
    %v2716 = vpack.c.b16 %v2536, %v2532
    %v2717 = vpack.c.b16 %v2537, %v2533
    %v2718 = vpack.c.b16 %v2538, %v2534
    %v2719 = vpack.c.b16 %v2539, %v2535
    %v2720 = vpack.c.b16 %v2544, %v2540
    %v2721 = vpack.c.b16 %v2545, %v2541
    %v2722 = vpack.c.b16 %v2546, %v2542
    %v2723 = vpack.c.b16 %v2547, %v2543
    %v2724 = vpack.c.b16 %v2552, %v2548
    %v2725 = vpack.c.b16 %v2553, %v2549
    %v2726 = vpack.c.b16 %v2554, %v2550
    %v2727 = vpack.c.b16 %v2555, %v2551
    %v2728 = vpack.c.b16 %v2560, %v2556
    %v2729 = vpack.c.b16 %v2561, %v2557
    %v2730 = vpack.c.b16 %v2562, %v2558
    %v2731 = vpack.c.b16 %v2563, %v2559
    %v2732 = vpack.c.b16 %v2568, %v2564
    %v2733 = vpack.c.b16 %v2569, %v2565
    %v2734 = vpack.c.b16 %v2570, %v2566
    %v2735 = vpack.c.b16 %v2571, %v2567
    %v2736 = vpack.c.b16 %v2576, %v2572
    %v2737 = vpack.c.b16 %v2577, %v2573
    %v2738 = vpack.c.b16 %v2578, %v2574
    %v2739 = vpack.c.b16 %v2579, %v2575
    %v2740 = vpack.c.b16 %v2584, %v2580
    %v2741 = vpack.c.b16 %v2585, %v2581
    %v2742 = vpack.c.b16 %v2586, %v2582
    %v2743 = vpack.c.b16 %v2587, %v2583
    %v2744 = vpack.c.b16 %v2592, %v2588
    %v2745 = vpack.c.b16 %v2593, %v2589
    %v2746 = vpack.c.b16 %v2594, %v2590
    %v2747 = vpack.c.b16 %v2595, %v2591
    %v2748 = vpack.c.b16 %v2600, %v2596
    %v2749 = vpack.c.b16 %v2601, %v2597
    %v2750 = vpack.c.b16 %v2602, %v2598
    %v2751 = vpack.c.b16 %v2603, %v2599
    %v2752 = vpack.c.b16 %v2608, %v2604
    %v2753 = vpack.c.b16 %v2609, %v2605
    %v2754 = vpack.c.b16 %v2610, %v2606
    %v2755 = vpack.c.b16 %v2611, %v2607
    %v2756 = vpack.c.b16 %v2616, %v2612
    %v2757 = vpack.c.b16 %v2617, %v2613
    %v2758 = vpack.c.b16 %v2618, %v2614
    %v2759 = vpack.c.b16 %v2619, %v2615
    %v2760 = vpack.c.b16 %v2624, %v2620
    %v2761 = vpack.c.b16 %v2625, %v2621
    %v2762 = vpack.c.b16 %v2626, %v2622
    %v2763 = vpack.c.b16 %v2627, %v2623
    %v2764 = vpack.c.b16 %v2632, %v2628
    %v2765 = vpack.c.b16 %v2633, %v2629
    %v2766 = vpack.c.b16 %v2634, %v2630
    %v2767 = vpack.c.b16 %v2635, %v2631
    %v2768 = vpack.c.b16 %v2640, %v2636
    %v2769 = vpack.c.b16 %v2641, %v2637
    %v2770 = vpack.c.b16 %v2642, %v2638
    %v2771 = vpack.c.b16 %v2643, %v2639
    %2900 = vmatprep.subr.bf16.mxu0 %v2645
    %2901 = vmatpush1.bf16.msra.mxu0 %v2644
    %2902 = vmatprep.subr.bf16.mxu0 %v2649
    %2903 = vmatpush1.bf16.msra.mxu0 %v2648
    %2904 = vmatprep.subr.bf16.mxu0 %v2653
    %2905 = vmatpush1.bf16.msra.mxu0 %v2652
    %2906 = vmatprep.subr.bf16.mxu0 %v2657
    %2907 = vmatpush1.bf16.msra.mxu0 %v2656
    %2908 = vmatprep.subr.bf16.mxu0 %v2661
    %2909 = vmatpush1.bf16.msra.mxu0 %v2660
    %2910 = vmatprep.subr.bf16.mxu0 %v2665
    %2911 = vmatpush1.bf16.msra.mxu0 %v2664
    %2912 = vmatprep.subr.bf16.mxu0 %v2669
    %2913 = vmatpush1.bf16.msra.mxu0 %v2668
    %2914 = vmatprep.subr.bf16.mxu0 %v2673
    %2915 = vmatpush1.bf16.msra.mxu0 %v2672
    %2916 = vmatprep.subr.bf16.mxu0 %v2677
    %2917 = vmatpush1.bf16.msra.mxu0 %v2676
    %2918 = vmatprep.subr.bf16.mxu0 %v2681
    %2919 = vmatpush1.bf16.msra.mxu0 %v2680
    %2920 = vmatprep.subr.bf16.mxu0 %v2685
    %2921 = vmatpush1.bf16.msra.mxu0 %v2684
    %2922 = vmatprep.subr.bf16.mxu0 %v2689
    %2923 = vmatpush1.bf16.msra.mxu0 %v2688
    %2924 = vmatprep.subr.bf16.mxu0 %v2693
    %2925 = vmatpush1.bf16.msra.mxu0 %v2692
    %2926 = vmatprep.subr.bf16.mxu0 %v2697
    %2927 = vmatpush1.bf16.msra.mxu0 %v2696
    %2928 = vmatprep.subr.bf16.mxu0 %v2701
    %2929 = vmatpush1.bf16.msra.mxu0 %v2700
    %2930 = vmatprep.subr.bf16.mxu0 %v2705
    %2931 = vmatpush1.bf16.msra.mxu0 %v2704
    %2932 = vmatprep.mubr.bf16.mxu0 %v122
    %2933 = vmatmul.mubr.bf16.gmra.mrb[0].mxu0 %v121
    %v2934 = vpop.f32.mrb[0].mxu0
    %v2935 = vadd.f32 %v2243, %v2934
    %v2936 = vpop.f32.mrb[0].mxu0
    %v2937 = vadd.f32 %v2247, %v2936
    %v2938 = vpop.f32.mrb[0].mxu0
    %v2939 = vadd.f32 %v2243, %v2938
    %v2940 = vpop.f32.mrb[0].mxu0
    %v2941 = vadd.f32 %v2247, %v2940
    %2942 = vdwg.mxu0
    %2943 = vmatprep.subr.bf16.mxu0 %v2709
    %2944 = vmatpush1.bf16.msra.mxu0 %v2708
    %2945 = vmatprep.subr.bf16.mxu0 %v2713
    %2946 = vmatpush1.bf16.msra.mxu0 %v2712
    %2947 = vmatprep.subr.bf16.mxu0 %v2717
    %2948 = vmatpush1.bf16.msra.mxu0 %v2716
    %2949 = vmatprep.subr.bf16.mxu0 %v2721
    %2950 = vmatpush1.bf16.msra.mxu0 %v2720
    %2951 = vmatprep.subr.bf16.mxu0 %v2725
    %2952 = vmatpush1.bf16.msra.mxu0 %v2724
    %2953 = vmatprep.subr.bf16.mxu0 %v2729
    %2954 = vmatpush1.bf16.msra.mxu0 %v2728
    %2955 = vmatprep.subr.bf16.mxu0 %v2733
    %2956 = vmatpush1.bf16.msra.mxu0 %v2732
    %2957 = vmatprep.subr.bf16.mxu0 %v2737
    %2958 = vmatpush1.bf16.msra.mxu0 %v2736
    %2959 = vmatprep.subr.bf16.mxu0 %v2741
    %2960 = vmatpush1.bf16.msra.mxu0 %v2740
    %2961 = vmatprep.subr.bf16.mxu0 %v2745
    %2962 = vmatpush1.bf16.msra.mxu0 %v2744
    %2963 = vmatprep.subr.bf16.mxu0 %v2749
    %2964 = vmatpush1.bf16.msra.mxu0 %v2748
    %2965 = vmatprep.subr.bf16.mxu0 %v2753
    %2966 = vmatpush1.bf16.msra.mxu0 %v2752
    %2967 = vmatprep.subr.bf16.mxu0 %v2757
    %2968 = vmatpush1.bf16.msra.mxu0 %v2756
    %2969 = vmatprep.subr.bf16.mxu0 %v2761
    %2970 = vmatpush1.bf16.msra.mxu0 %v2760
    %2971 = vmatprep.subr.bf16.mxu0 %v2765
    %2972 = vmatpush1.bf16.msra.mxu0 %v2764
    %2973 = vmatprep.subr.bf16.mxu0 %v2769
    %2974 = vmatpush1.bf16.msra.mxu0 %v2768
    %2975 = vmatprep.mubr.bf16.mxu0 %v124
    %2976 = vmatmul.mubr.bf16.gmra.mrb[0].mxu0 %v123
    %v2977 = vpop.f32.mrb[0].mxu0
    %v2978 = vadd.f32 %v2935, %v2977
    %v2979 = vpop.f32.mrb[0].mxu0
    %v2980 = vadd.f32 %v2937, %v2979
    %v2981 = vpop.f32.mrb[0].mxu0
    %v2982 = vadd.f32 %v2939, %v2981
    %v2983 = vpop.f32.mrb[0].mxu0
    %v2984 = vadd.f32 %v2941, %v2983
    %2985 = vdwg.mxu0
    %2986 = vmatprep.subr.bf16.mxu0 %v2647
    %2987 = vmatpush1.bf16.msra.mxu0 %v2646
    %2988 = vmatprep.subr.bf16.mxu0 %v2651
    %2989 = vmatpush1.bf16.msra.mxu0 %v2650
    %2990 = vmatprep.subr.bf16.mxu0 %v2655
    %2991 = vmatpush1.bf16.msra.mxu0 %v2654
    %2992 = vmatprep.subr.bf16.mxu0 %v2659
    %2993 = vmatpush1.bf16.msra.mxu0 %v2658
    %2994 = vmatprep.subr.bf16.mxu0 %v2663
    %2995 = vmatpush1.bf16.msra.mxu0 %v2662
    %2996 = vmatprep.subr.bf16.mxu0 %v2667
    %2997 = vmatpush1.bf16.msra.mxu0 %v2666
    %2998 = vmatprep.subr.bf16.mxu0 %v2671
    %2999 = vmatpush1.bf16.msra.mxu0 %v2670
    %3000 = vmatprep.subr.bf16.mxu0 %v2675
    %3001 = vmatpush1.bf16.msra.mxu0 %v2674
    %3002 = vmatprep.subr.bf16.mxu0 %v2679
    %3003 = vmatpush1.bf16.msra.mxu0 %v2678
    %3004 = vmatprep.subr.bf16.mxu0 %v2683
    %3005 = vmatpush1.bf16.msra.mxu0 %v2682
    %3006 = vmatprep.subr.bf16.mxu0 %v2687
    %3007 = vmatpush1.bf16.msra.mxu0 %v2686
    %3008 = vmatprep.subr.bf16.mxu0 %v2691
    %3009 = vmatpush1.bf16.msra.mxu0 %v2690
    %3010 = vmatprep.subr.bf16.mxu0 %v2695
    %3011 = vmatpush1.bf16.msra.mxu0 %v2694
    %3012 = vmatprep.subr.bf16.mxu0 %v2699
    %3013 = vmatpush1.bf16.msra.mxu0 %v2698
    %3014 = vmatprep.subr.bf16.mxu0 %v2703
    %3015 = vmatpush1.bf16.msra.mxu0 %v2702
    %3016 = vmatprep.subr.bf16.mxu0 %v2707
    %3017 = vmatpush1.bf16.msra.mxu0 %v2706
    %3018 = vmatprep.mubr.bf16.mxu0 %v122
    %3019 = vmatmul.mubr.bf16.gmra.mrb[0].mxu0 %v121
    %v3020 = vpop.f32.mrb[0].mxu0
    %v3021 = vadd.f32 %v2251, %v3020
    %v3022 = vpop.f32.mrb[0].mxu0
    %v3023 = vadd.f32 %v2255, %v3022
    %v3024 = vpop.f32.mrb[0].mxu0
    %v3025 = vadd.f32 %v2251, %v3024
    %v3026 = vpop.f32.mrb[0].mxu0
    %v3027 = vadd.f32 %v2255, %v3026
    %3028 = vdwg.mxu0
    %3029 = vmatprep.subr.bf16.mxu0 %v2711
    %3030 = vmatpush1.bf16.msra.mxu0 %v2710
    %3031 = vmatprep.subr.bf16.mxu0 %v2715
    %3032 = vmatpush1.bf16.msra.mxu0 %v2714
    %3033 = vmatprep.subr.bf16.mxu0 %v2719
    %3034 = vmatpush1.bf16.msra.mxu0 %v2718
    %3035 = vmatprep.subr.bf16.mxu0 %v2723
    %3036 = vmatpush1.bf16.msra.mxu0 %v2722
    %3037 = vmatprep.subr.bf16.mxu0 %v2727
    %3038 = vmatpush1.bf16.msra.mxu0 %v2726
    %3039 = vmatprep.subr.bf16.mxu0 %v2731
    %3040 = vmatpush1.bf16.msra.mxu0 %v2730
    %3041 = vmatprep.subr.bf16.mxu0 %v2735
    %3042 = vmatpush1.bf16.msra.mxu0 %v2734
    %3043 = vmatprep.subr.bf16.mxu0 %v2739
    %3044 = vmatpush1.bf16.msra.mxu0 %v2738
    %3045 = vmatprep.subr.bf16.mxu0 %v2743
    %3046 = vmatpush1.bf16.msra.mxu0 %v2742
    %3047 = vmatprep.subr.bf16.mxu0 %v2747
    %3048 = vmatpush1.bf16.msra.mxu0 %v2746
    %3049 = vmatprep.subr.bf16.mxu0 %v2751
    %3050 = vmatpush1.bf16.msra.mxu0 %v2750
    %3051 = vmatprep.subr.bf16.mxu0 %v2755
    %3052 = vmatpush1.bf16.msra.mxu0 %v2754
    %3053 = vmatprep.subr.bf16.mxu0 %v2759
    %3054 = vmatpush1.bf16.msra.mxu0 %v2758
    %3055 = vmatprep.subr.bf16.mxu0 %v2763
    %3056 = vmatpush1.bf16.msra.mxu0 %v2762
    %3057 = vmatprep.subr.bf16.mxu0 %v2767
    %3058 = vmatpush1.bf16.msra.mxu0 %v2766
    %3059 = vmatprep.subr.bf16.mxu0 %v2771
    %3060 = vmatpush1.bf16.msra.mxu0 %v2770
    %3061 = vmatprep.mubr.bf16.mxu0 %v124
    %3062 = vmatmul.mubr.bf16.gmra.mrb[0].mxu0 %v123
    %v3063 = vpop.f32.mrb[0].mxu0
    %v3064 = vadd.f32 %v3021, %v3063
    %v3065 = vpop.f32.mrb[0].mxu0
    %v3066 = vadd.f32 %v3023, %v3065
    %v3067 = vpop.f32.mrb[0].mxu0
    %v3068 = vadd.f32 %v3025, %v3067
    %v3069 = vpop.f32.mrb[0].mxu0
    %v3070 = vadd.f32 %v3027, %v3069
    %3071 = vdwg.mxu0
    %v3072 = vpack.c.bf16 %v2982, %v2978
    %v3073 = vpack.c.bf16 %v2984, %v2980
    %v3074 = vpack.c.bf16 %v3068, %v3064
    %v3075 = vpack.c.bf16 %v3070, %v3066
    %v3080 = vunpack.c.l.b16 %v3072
    %v3081 = vunpack.c.l.b16 %v3073
    %v3082 = vunpack.c.l.b16 %v3074
    %v3083 = vunpack.c.l.b16 %v3075
    %v3084 = vunpack.c.h.b16 %v3072
    %v3085 = vunpack.c.h.b16 %v3073
    %v3086 = vunpack.c.h.b16 %v3074
    %v3087 = vunpack.c.h.b16 %v3075
    %v3088 = vpack.c.b16 %v3081, %v3080
    %v3089 = vpack.c.b16 %v3083, %v3082
    %v3090 = vpack.c.b16 %v3085, %v3084
    %v3091 = vpack.c.b16 %v3087, %v3086
    %s3096 = scalar_lea.vmem [#allocation11], 64
    %3097 = vst [vmem:[%s3096] sm:$0xff] %v3088
    %3098 = vst [vmem:[%s3096 + $0x8] sm:$0xff] %v3089
    %3099 = vst [vmem:[%s3096 + $0x10] sm:$0xff] %v3090
    %3100 = vst [vmem:[%s3096 + $0x18] sm:$0xff] %v3091
    // Predicated region
    $region42: #{tpu_custom_call.1} parent=1 // pred_check
      _
    $region43: #{tpu_custom_call.1} parent=1 // pred_check_branch
      %3102 = sbr.rel (0) target = $region45
    $region44: #{tpu_custom_call.1} parent=1 // pred_region
      %s3104 = ssub.s32 1536, 1536
      %3105 = vsyncadd [#allocation4], %s3104
      %s3106 = sshll.u32 [#allocation11], 4
      %s3107 = int_to_ptr.vmem [resolvable:$true] %s3106
      %3112 = dma.vmem_to_hbm [thread:$0]  %s3107, 1536, %s5, [#allocation4], 256, 256, 16
    $region45: #{tpu_custom_call.1} parent=1 // pred_fallthru
      _
    // Predicated region
    $region46: #{tpu_custom_call.1} parent=1 // pred_check
      _
    $region47: #{tpu_custom_call.1} parent=1 // pred_check_branch
      %3114 = sbr.rel (0) target = $region49
    $region48: #{tpu_custom_call.1} parent=1 // pred_region
      %3115 = dma.done [#allocation4], 1536
    $region49: #{tpu_custom_call.1} parent=1 // pred_fallthru
      _
    %3116 = vsyncpa [#allocation3], 1
    %3117 = vsyncpa [#allocation6], 1
    %3118 = vsyncpa [#allocation9], 1
    %3119 = vsyncpa [#allocation4], 1

</llo_original>
